<compile_context>
chip_gen: v7x
topology: tpu7x:2x2x1
jax: 0.10.0
libtpu: 0.0.40
codegen_flags: <defaults>
</compile_context>

<pallas_src>
import jax
import jax.numpy as jnp
from jax import lax
from jax.experimental import pallas as pl
from jax.experimental.pallas import tpu as pltpu


def _mul_conv1x1_kernel(s_ref, w_ref, x_ref, o_ref, acc_ref):
    # Per grid step k (k-th chunk of the Cin reduction):
    #   s_ref: (tk, 1)      per-input-channel scale chunk
    #   w_ref: (tk, Cout)   K-major 1x1 conv weight chunk
    #   x_ref: (tk, M)      activation chunk, native NCHW viewed as (Cin, H*W)
    #   o_ref: (Cout, M)    output (resident across the reduction axis)
    #   acc_ref: (Cout, M)  f32 accumulator scratch
    k = pl.program_id(0)

    @pl.when(k == 0)
    def _init():
        acc_ref[...] = jnp.zeros_like(acc_ref)

    # Fold the scale into the small weight chunk in f32, then feed the MXU
    # bf16 operands (f32 accumulation via preferred_element_type).
    w_scaled = (w_ref[...] * s_ref[...]).astype(jnp.bfloat16)   # (tk, Cout)
    x_bf16 = x_ref[...].astype(jnp.bfloat16)                    # (tk, M)

    # Contract dim 0 of both operands: (tk, Cout)^T @ (tk, M) -> (Cout, M).
    acc_ref[...] += lax.dot_general(
        w_scaled,
        x_bf16,
        dimension_numbers=(((0,), (0,)), ((), ())),
        preferred_element_type=jnp.float32,
    )

    @pl.when(k == pl.num_programs(0) - 1)
    def _store():
        o_ref[...] = acc_ref[...].astype(o_ref.dtype)


def mul_conv1x1(x_nchw, scale_nc11, weight_oi11, *, tk=160):
    """conv2d_1x1(scale * x), no bias — matches the PyTorch module's forward.

    x_nchw:      (1, C_in, H, W)     float32
    scale_nc11:  (1, C_in, 1, 1)     float32
    weight_oi11: (C_out, C_in, 1, 1) float32
    returns:     (1, C_out, H, W)    float32
    """
    n, c_in, h, w = x_nchw.shape
    c_out = weight_oi11.shape[0]
    assert n == 1 and scale_nc11.shape[0] == 1, "kernel assumes batch == 1"
    assert scale_nc11.shape[1] == c_in
    assert c_in % tk == 0 and tk % 8 == 0, "K tile must divide C_in, mult of 8"

    m = h * w
    n_k = c_in // tk

    # Free contiguous (row-major) views — no extra HBM passes.
    x_km = x_nchw.reshape(c_in, m)        # (480, 784)
    s_k1 = scale_nc11.reshape(c_in, 1)    # (480, 1)
    # K-major weight so each reduction chunk is a sublane-tiled block.
    # TODO(synk): in a real deployment pre-transpose the (tiny, 150 KB) weight
    # once at load time instead of per call.
    w_kn = weight_oi11.reshape(c_out, c_in).T   # (480, 80)

    flops = 2 * m * c_in * c_out
    bytes_accessed = 4 * (x_km.size + s_k1.size + w_kn.size + c_out * m)

    out_nm = pl.pallas_call(
        _mul_conv1x1_kernel,
        out_shape=jax.ShapeDtypeStruct((c_out, m), x_nchw.dtype),
        grid=(n_k,),
        in_specs=[
            pl.BlockSpec((tk, 1), lambda k: (k, 0)),        # scale chunk
            pl.BlockSpec((tk, c_out), lambda k: (k, 0)),    # weight chunk
            pl.BlockSpec((tk, m), lambda k: (k, 0)),        # x chunk (big DMA)
        ],
        out_specs=pl.BlockSpec((c_out, m), lambda k: (0, 0)),
        scratch_shapes=[pltpu.VMEM((c_out, m), jnp.float32)],
        compiler_params=pltpu.CompilerParams(
            dimension_semantics=("arbitrary",),
        ),
        cost_estimate=pl.CostEstimate(
            flops=flops, transcendentals=0, bytes_accessed=bytes_accessed
        ),
    )(s_k1, w_kn, x_km)

    # Free reshape back to NCHW.
    return out_nm.reshape(n, c_out, h, w)


if __name__ == "__main__":
    key = jax.random.PRNGKey(0)
    k1, k2, k3 = jax.random.split(key, 3)

    # Shapes implied by the module's forward:
    #   x215: (1, 480, 28, 28), x220: (1, 480, 1, 1), conv weight: (80, 480, 1, 1)
    N, C_IN, H, W = 1, 480, 28, 28
    C_OUT = 80

    x215 = jax.random.normal(k1, (N, C_IN, H, W), dtype=jnp.float32)
    x220 = jax.random.normal(k2, (N, C_IN, 1, 1), dtype=jnp.float32)
    # Deterministic conv weight init (kaiming-uniform-ish scale, fixed seed).
    fan_in = C_IN  # 1x1 kernel
    bound = (1.0 / fan_in) ** 0.5
    weight = jax.random.uniform(
        k3, (C_OUT, C_IN, 1, 1), dtype=jnp.float32, minval=-bound, maxval=bound
    )

    fn = jax.jit(mul_conv1x1)
    out = jax.block_until_ready(fn(x215, x220, weight))

    # Sanity check against plain-JAX f32 reference of the same math.
    ref = jnp.einsum(
        "nchw,oc->nohw", x215 * x220, weight.reshape(C_OUT, C_IN)
    )
    assert out.shape == (N, C_OUT, H, W)
    max_err = float(jnp.max(jnp.abs(out - ref)))
    # bf16 MXU operands (f32 accumulation) over K=480 give a few e-3 absolute
    # error on O(1) outputs; tolerance sized accordingly.
    assert jnp.allclose(out, ref, atol=3e-2, rtol=3e-2), max_err

    print("KERNEL_OK")
</pallas_src>

<mosaic_0001>
module attributes {stable_mosaic.version = 11 : i64} {
  func.func @_mul_conv1x1_kernel(%arg0: i32, %arg1: memref<160x1xf32, #tpu.memory_space<vmem>>, %arg2: memref<160x80xf32, #tpu.memory_space<vmem>>, %arg3: memref<160x784xf32, #tpu.memory_space<vmem>>, %arg4: memref<80x784xf32, #tpu.memory_space<vmem>>, %arg5: memref<80x784xf32, #tpu.memory_space<vmem>>) attributes {dimension_semantics = [#tpu.dimension_semantics<arbitrary>], iteration_bounds = array<i64: 3>, scalar_prefetch = 0 : i64, scratch_operands = 1 : i64, tpu.core_type = #tpu.core_type<tc>, window_params = [{transform_indices = @transform_0, window_bounds = array<i64: 160, 1>}, {transform_indices = @transform_1, window_bounds = array<i64: 160, 80>}, {transform_indices = @transform_2, window_bounds = array<i64: 160, 784>}, {pipeline_mode = #tpu.pipeline_mode<synchronous>, transform_indices = @transform_3, window_bounds = array<i64: 80, 784>}]} {
    %c0_i32 = arith.constant 0 : i32
    %0 = arith.cmpi eq, %arg0, %c0_i32 : i32
    %1 = arith.extui %0 : i1 to i32
    %c0_i32_0 = arith.constant 0 : i32
    %2 = arith.cmpi ne, %1, %c0_i32_0 : i32
    scf.if %2 {
      %cst_11 = arith.constant 0.000000e+00 : f32
      %17 = vector.broadcast %cst_11 : f32 to vector<80x784xf32>
      %c0_12 = arith.constant 0 : index
      %c0_13 = arith.constant 0 : index
      %18 = vector.load %arg5[%c0_12, %c0_13] : memref<80x784xf32, #tpu.memory_space<vmem>>, vector<80x784xf32>
      tpu.vector_store %arg5[%c0_12, %c0_13], %17 {strides = array<i32>} : memref<80x784xf32, #tpu.memory_space<vmem>>, vector<80x784xf32>,
    } else {
    }
    %c0 = arith.constant 0 : index
    %c0_1 = arith.constant 0 : index
    %3 = vector.load %arg2[%c0, %c0_1] : memref<160x80xf32, #tpu.memory_space<vmem>>, vector<160x80xf32>
    %c0_2 = arith.constant 0 : index
    %c0_3 = arith.constant 0 : index
    %4 = vector.load %arg1[%c0_2, %c0_3] : memref<160x1xf32, #tpu.memory_space<vmem>>, vector<160x1xf32>
    %5 = vector.broadcast %4 : vector<160x1xf32> to vector<160x80xf32>
    %6 = arith.mulf %3, %5 : vector<160x80xf32>
    %7 = arith.truncf %6 : vector<160x80xf32> to vector<160x80xbf16>
    %c0_4 = arith.constant 0 : index
    %c0_5 = arith.constant 0 : index
    %8 = vector.load %arg3[%c0_4, %c0_5] : memref<160x784xf32, #tpu.memory_space<vmem>>, vector<160x784xf32>
    %9 = arith.truncf %8 : vector<160x784xf32> to vector<160x784xbf16>
    %c0_6 = arith.constant 0 : index
    %c0_7 = arith.constant 0 : index
    %10 = vector.load %arg5[%c0_6, %c0_7] : memref<80x784xf32, #tpu.memory_space<vmem>>, vector<80x784xf32>
    %cst = arith.constant dense<0.000000e+00> : vector<80x784xf32>
    %11 = tpu.matmul %7, %9, %cst {dimension_numbers = #tpu.dot_dimension_numbers<[0], [0], [1], [1], [0, 1, 1, 1], [], []>} : vector<160x80xbf16>, vector<160x784xbf16>, vector<80x784xf32> -> vector<80x784xf32>
    %12 = arith.addf %10, %11 : vector<80x784xf32>
    %c0_8 = arith.constant 0 : index
    %c0_9 = arith.constant 0 : index
    %13 = vector.load %arg5[%c0_8, %c0_9] : memref<80x784xf32, #tpu.memory_space<vmem>>, vector<80x784xf32>
    tpu.vector_store %arg5[%c0_8, %c0_9], %12 {strides = array<i32>} : memref<80x784xf32, #tpu.memory_space<vmem>>, vector<80x784xf32>,
    %c2_i32 = arith.constant 2 : i32
    %14 = arith.cmpi eq, %arg0, %c2_i32 : i32
    %15 = arith.extui %14 : i1 to i32
    %c0_i32_10 = arith.constant 0 : i32
    %16 = arith.cmpi ne, %15, %c0_i32_10 : i32
    scf.if %16 {
      %c0_11 = arith.constant 0 : index
      %c0_12 = arith.constant 0 : index
      %17 = vector.load %arg5[%c0_11, %c0_12] : memref<80x784xf32, #tpu.memory_space<vmem>>, vector<80x784xf32>
      %c0_13 = arith.constant 0 : index
      %c0_14 = arith.constant 0 : index
      %18 = vector.load %arg4[%c0_13, %c0_14] : memref<80x784xf32, #tpu.memory_space<vmem>>, vector<80x784xf32>
      tpu.vector_store %arg4[%c0_13, %c0_14], %17 {strides = array<i32>} : memref<80x784xf32, #tpu.memory_space<vmem>>, vector<80x784xf32>,
    } else {
    }
    return
  }
  func.func @transform_0(%arg0: i32) -> (i32, i32) {
    %c0_i32 = arith.constant 0 : i32
    %c0_i32_0 = arith.constant 0 : i32
    return %arg0, %c0_i32 : i32, i32
  }
  func.func @transform_1(%arg0: i32) -> (i32, i32) {
    %c0_i32 = arith.constant 0 : i32
    %c0_i32_0 = arith.constant 0 : i32
    return %arg0, %c0_i32 : i32, i32
  }
  func.func @transform_2(%arg0: i32) -> (i32, i32) {
    %c0_i32 = arith.constant 0 : i32
    %c0_i32_0 = arith.constant 0 : i32
    return %arg0, %c0_i32 : i32, i32
  }
  func.func @transform_3(%arg0: i32) -> (i32, i32) {
    %c0_i32 = arith.constant 0 : i32
    %c0_i32_0 = arith.constant 0 : i32
    %c0_i32_1 = arith.constant 0 : i32
    return %c0_i32, %c0_i32_0 : i32, i32
  }
}

</mosaic_0001>

<llo_original>
// kernel: mul_conv1x1.1
$region0: #{mul_conv1x1.1}
  #allocation0 [shape = 'u32[]', space=smem, size = 0x4, offset = 0x4, fixed_abs, tag = 'smem constant byte address 0x4 - core index']
  #allocation1 [shape = 'u32[144,128]{1,0:T(1,128)}', space=vmem, size = 0x12000, scoped, tag = 'internal scratch']
  #allocation2 [shape = 'f32[80,784]{1,0:T(8,128)}', space=vmem, size = 0x46000, scoped, tag = 'scratch operand']
  %s0 = inlined_call_operand.vmem [shape: f32[480,1], index: 0, kind: input, shape index: {}]
  %s1 = inlined_call_operand.vmem [shape: f32[480,80], index: 1, kind: input, shape index: {}]
  %s2 = inlined_call_operand.vmem [shape: f32[480,784], index: 2, kind: input, shape index: {}]
  %s3 = inlined_call_operand.vmem [shape: f32[80,784], index: 3, kind: output, shape index: {}]
  %s4 = sld [smem:[#allocation0]]
  $region53: #{mul_conv1x1.1} parent=0
    _
  %s6 = ssub.s32 1, %s4
  %s7 = scalar_select 0, %s6, %s4
  loop: start=0, step=1, limit=5
  $region2: #{mul_conv1x1.1} parent=0 // loop_pre_header
    _
  $region3: #{mul_conv1x1.1} parent=0 // loop_header
    %s9 = sphi 0, %s13
    %p10 = scmp.ge.s32.totalorder %s9, 5
    %s19 = sphi 0, %s21
    %s22 = sphi 0, %s19
    %s23 = sphi 0, %s22
    %s39 = sphi 0, %s23
    %s45 = sphi 0, %s47
    %s48 = sphi 0, %s45
    %s49 = sphi 0, %s48
    %s65 = sphi 0, %s49
    %s71 = sphi 0, %s73
    %s74 = sphi 0, %s71
    %s75 = sphi 0, %s74
    %s91 = sphi 0, %s75
    %s95 = sphi 0, %s95
    %s97 = sphi 0, %s95
    %s98 = sphi 0, %s97
    %s112 = sphi 0, %s98
  $region4: #{mul_conv1x1.1} parent=0 // loop_header_branch
    %12 = sbr.rel (%p10) target = $region8
  $region5: #{mul_conv1x1.1} parent=0 // loop_body
    %s14 = ssub.s32 %s9, 1
    %s15 = ssub.s32 %s9, 2
    %s16 = sadd.s32 %s9, 1
    %s17 = ssub.s32 %s9, %s16
    %p18 = scmp.eq.s32.totalorder %s17, 0
    %s20 = sadd.s32 %s19, 1
    %s21 = scalar_select %p18, %s19, %s20
    %p24 = pneg %p18
    %p25 = scmp.eq.s32.totalorder %s9, 2
    %p26 = por %p24, %p25
    %p27 = scmp.ne.s32.totalorder %s19, %s22
    %p28 = scmp.eq.s32.totalorder %s9, 0
    %p29 = por %p27, %p28
    %p30 = scmp.ne.s32.totalorder %s19, %s22
    %p31 = scmp.eq.s32.totalorder %s14, 2
    %p32 = por %p30, %p31
    %p33 = scmp.ne.s32.totalorder %s22, %s23
    %p34 = scmp.eq.s32.totalorder %s14, 0
    %p35 = por %p33, %p34
    %p36 = scmp.ne.s32.totalorder %s22, %s23
    %p37 = scmp.eq.s32.totalorder %s15, 2
    %p38 = por %p36, %p37
    %p40 = scmp.ne.s32.totalorder %s23, %s39
    %p41 = scmp.eq.s32.totalorder %s15, 0
    %p42 = por %p40, %p41
    %s43 = ssub.s32 %s9, %s16
    %p44 = scmp.eq.s32.totalorder %s43, 0
    %s46 = sadd.s32 %s45, 1
    %s47 = scalar_select %p44, %s45, %s46
    %p50 = pneg %p44
    %p51 = scmp.eq.s32.totalorder %s9, 2
    %p52 = por %p50, %p51
    %p53 = scmp.ne.s32.totalorder %s45, %s48
    %p54 = scmp.eq.s32.totalorder %s9, 0
    %p55 = por %p53, %p54
    %p56 = scmp.ne.s32.totalorder %s45, %s48
    %p57 = scmp.eq.s32.totalorder %s14, 2
    %p58 = por %p56, %p57
    %p59 = scmp.ne.s32.totalorder %s48, %s49
    %p60 = scmp.eq.s32.totalorder %s14, 0
    %p61 = por %p59, %p60
    %p62 = scmp.ne.s32.totalorder %s48, %s49
    %p63 = scmp.eq.s32.totalorder %s15, 2
    %p64 = por %p62, %p63
    %p66 = scmp.ne.s32.totalorder %s49, %s65
    %p67 = scmp.eq.s32.totalorder %s15, 0
    %p68 = por %p66, %p67
    %s69 = ssub.s32 %s9, %s16
    %p70 = scmp.eq.s32.totalorder %s69, 0
    %s72 = sadd.s32 %s71, 1
    %s73 = scalar_select %p70, %s71, %s72
    %p76 = pneg %p70
    %p77 = scmp.eq.s32.totalorder %s9, 2
    %p78 = por %p76, %p77
    %p79 = scmp.ne.s32.totalorder %s71, %s74
    %p80 = scmp.eq.s32.totalorder %s9, 0
    %p81 = por %p79, %p80
    %p82 = scmp.ne.s32.totalorder %s71, %s74
    %p83 = scmp.eq.s32.totalorder %s14, 2
    %p84 = por %p82, %p83
    %p85 = scmp.ne.s32.totalorder %s74, %s75
    %p86 = scmp.eq.s32.totalorder %s14, 0
    %p87 = por %p85, %p86
    %p88 = scmp.ne.s32.totalorder %s74, %s75
    %p89 = scmp.eq.s32.totalorder %s15, 2
    %p90 = por %p88, %p89
    %p92 = scmp.ne.s32.totalorder %s75, %s91
    %p93 = scmp.eq.s32.totalorder %s15, 0
    %p94 = por %p92, %p93
    %s96 = sadd.s32 %s95, 1
    %p99 = scmp.eq.s32.totalorder %s9, 2
    %p100 = scmp.ne.s32.totalorder %s95, %s97
    %p101 = scmp.eq.s32.totalorder %s9, 0
    %p102 = por %p100, %p101
    %p103 = scmp.ne.s32.totalorder %s95, %s97
    %p104 = scmp.eq.s32.totalorder %s14, 2
    %p105 = por %p103, %p104
    %p106 = scmp.ne.s32.totalorder %s97, %s98
    %p107 = scmp.eq.s32.totalorder %s14, 0
    %p108 = por %p106, %p107
    %p109 = scmp.ne.s32.totalorder %s97, %s98
    %p110 = scmp.eq.s32.totalorder %s15, 2
    %p111 = por %p109, %p110
    %p113 = scmp.ne.s32.totalorder %s98, %s112
    %p114 = scmp.eq.s32.totalorder %s15, 0
    %p115 = por %p113, %p114
    %p116 = scmp.le.s32.totalorder 1, %s9
    %p117 = scmp.lt.s32.totalorder %s9, 4
    %p118 = pnand %p116, %p117
    %p119 = pneg %p118
    // Predicated region
    $region9: #{mul_conv1x1.1} parent=5 // pred_check
      _
    $region10: #{mul_conv1x1.1} parent=5 // pred_check_branch
      %121 = sbr.rel (%p118) target = $region12
    $region11: #{mul_conv1x1.1} parent=5 // pred_region
      %s122 = ssub.s32 %s9, 1
    $region12: #{mul_conv1x1.1} parent=5 // pred_fallthru
      _
    %p123 = scmp.lt.s32.totalorder %s9, 3
    // Predicated region
    $region13: #{mul_conv1x1.1} parent=5 // pred_check
      %p124 = pneg %p123
    $region14: #{mul_conv1x1.1} parent=5 // pred_check_branch
      %126 = sbr.rel (%p124) target = $region16
    $region15: #{mul_conv1x1.1} parent=5 // pred_region
      // Predicated region
      $region17: #{mul_conv1x1.1} parent=15 // pred_check
        %p127 = pneg %p29
      $region18: #{mul_conv1x1.1} parent=15 // pred_check_branch
        %129 = sbr.rel (%p127) target = $region20
      $region19: #{mul_conv1x1.1} parent=15 // pred_region
        %s130 = smul.u32 20, %s9
        %p131 = scmp.lt.s32.totalorder %s130, 59
        %s132 = scalar_select %p131, %s130, 59
        %s133 = smul.addr %s132, 8
        %s134 = scalar_lea.vmem %s0, %s133
        %s135 = smul.u32 20, %s9
      $region20: #{mul_conv1x1.1} parent=15 // pred_fallthru
        _
      // Predicated region
      $region21: #{mul_conv1x1.1} parent=15 // pred_check
        %p136 = pneg %p55
      $region22: #{mul_conv1x1.1} parent=15 // pred_check_branch
        %138 = sbr.rel (%p136) target = $region24
      $region23: #{mul_conv1x1.1} parent=15 // pred_region
        %s139 = smul.u32 20, %s9
        %p140 = scmp.lt.s32.totalorder %s139, 59
        %s141 = scalar_select %p140, %s139, 59
        %s142 = smul.addr %s141, 8
        %s143 = scalar_lea.vmem %s1, %s142
        %s144 = smul.u32 20, %s9
      $region24: #{mul_conv1x1.1} parent=15 // pred_fallthru
        _
      // Predicated region
      $region25: #{mul_conv1x1.1} parent=15 // pred_check
        %p145 = pneg %p81
      $region26: #{mul_conv1x1.1} parent=15 // pred_check_branch
        %147 = sbr.rel (%p145) target = $region28
      $region27: #{mul_conv1x1.1} parent=15 // pred_region
        %s148 = smul.u32 20, %s9
        %p149 = scmp.lt.s32.totalorder %s148, 59
        %s150 = scalar_select %p149, %s148, 59
        %s151 = smul.addr %s150, 7
        %s152 = smul.addr %s151, 8
        %s153 = scalar_lea.vmem %s2, %s152
        %s154 = smul.u32 20, %s9
      $region28: #{mul_conv1x1.1} parent=15 // pred_fallthru
        _
    $region16: #{mul_conv1x1.1} parent=5 // pred_fallthru
      _
    %p155 = scmp.le.s32.totalorder 1, %s9
    %p156 = scmp.lt.s32.totalorder %s9, 4
    %p157 = pnand %p155, %p156
    %p158 = pneg %p157
    // Predicated region
    $region29: #{mul_conv1x1.1} parent=5 // pred_check
      _
    $region30: #{mul_conv1x1.1} parent=5 // pred_check_branch
      %160 = sbr.rel (%p157) target = $region32
    $region31: #{mul_conv1x1.1} parent=5 // pred_region
      %s161 = ssub.s32 %s9, 1
      %s162 = smul.u32 20, %s14
      %p163 = scmp.lt.s32.totalorder %s162, 59
      %s164 = scalar_select %p163, %s162, 59
      %s165 = smul.addr %s164, 8
      %s166 = scalar_lea.vmem %s0, %s165
      %p167 = pneg %p35
      %p168 = pneg %p32
      %s169 = smul.u32 20, %s14
      %p170 = scmp.lt.s32.totalorder %s169, 59
      %s171 = scalar_select %p170, %s169, 59
      %s172 = smul.addr %s171, 8
      %s173 = scalar_lea.vmem %s1, %s172
      %p174 = pneg %p61
      %p175 = pneg %p58
      %s176 = smul.u32 20, %s14
      %p177 = scmp.lt.s32.totalorder %s176, 59
      %s178 = scalar_select %p177, %s176, 59
      %s179 = smul.addr %s178, 7
      %s180 = smul.addr %s179, 8
      %s181 = scalar_lea.vmem %s2, %s180
      %p182 = pneg %p87
      %p183 = pneg %p84
      %p184 = pneg %p108
      %p185 = pneg %p105
      %s186 = smul.u32 20, %s14
      %p187 = scmp.lt.s32.totalorder %s186, 59
      %s188 = scalar_select %p187, %s186, 59
      %s189 = smul.addr %s188, 8
      %s190 = scalar_lea.vmem %s0, %s189
      %s191 = smul.u32 20, %s14
      %s192 = smul.u32 20, %s14
      %p193 = scmp.lt.s32.totalorder %s192, 59
      %s194 = scalar_select %p193, %s192, 59
      %s195 = smul.addr %s194, 8
      %s196 = scalar_lea.vmem %s1, %s195
      %s197 = smul.u32 20, %s14
      %s198 = smul.u32 20, %s14
      %p199 = scmp.lt.s32.totalorder %s198, 59
      %s200 = scalar_select %p199, %s198, 59
      %s201 = smul.addr %s200, 7
      %s202 = smul.addr %s201, 8
      %s203 = scalar_lea.vmem %s2, %s202
      %s204 = smul.u32 20, %s14
      %p206 = scmp.eq.s32.totalorder %s14, 0
      // Predicated region
      $region33: #{mul_conv1x1.1} parent=31 // pred_check
        %p207 = pneg %p206
      $region34: #{mul_conv1x1.1} parent=31 // pred_check_branch
        %209 = sbr.rel (%p207) target = $region36
      $region35: #{mul_conv1x1.1} parent=31 // pred_region
        %210 = vst [vmem:[#allocation2] sm:$0xff] 0.0
        %211 = vst [vmem:[#allocation2 + $0x8] sm:$0xff] 0.0
        %212 = vst [vmem:[#allocation2 + $0x10] sm:$0xff] 0.0
        %213 = vst [vmem:[#allocation2 + $0x18] sm:$0xff] 0.0
        %214 = vst [vmem:[#allocation2 + $0x20] sm:$0xff] 0.0
        %215 = vst [vmem:[#allocation2 + $0x28] sm:$0xff] 0.0
        %vm216 = vcmask 130048
        %217 = vst.msk [vmem:[#allocation2 + $0x30] sm:$0xff] %vm216, 0.0
        %218 = vst [vmem:[#allocation2 + $0x38] sm:$0xff] 0.0
        %219 = vst [vmem:[#allocation2 + $0x40] sm:$0xff] 0.0
        %220 = vst [vmem:[#allocation2 + $0x48] sm:$0xff] 0.0
        %221 = vst [vmem:[#allocation2 + $0x50] sm:$0xff] 0.0
        %222 = vst [vmem:[#allocation2 + $0x58] sm:$0xff] 0.0
        %223 = vst [vmem:[#allocation2 + $0x60] sm:$0xff] 0.0
        %224 = vst.msk [vmem:[#allocation2 + $0x68] sm:$0xff] %vm216, 0.0
        %225 = vst [vmem:[#allocation2 + $0x70] sm:$0xff] 0.0
        %226 = vst [vmem:[#allocation2 + $0x78] sm:$0xff] 0.0
        %227 = vst [vmem:[#allocation2 + $0x80] sm:$0xff] 0.0
        %228 = vst [vmem:[#allocation2 + $0x88] sm:$0xff] 0.0
        %229 = vst [vmem:[#allocation2 + $0x90] sm:$0xff] 0.0
        %230 = vst [vmem:[#allocation2 + $0x98] sm:$0xff] 0.0
        %231 = vst.msk [vmem:[#allocation2 + $0xa0] sm:$0xff] %vm216, 0.0
        %232 = vst [vmem:[#allocation2 + $0xa8] sm:$0xff] 0.0
        %233 = vst [vmem:[#allocation2 + $0xb0] sm:$0xff] 0.0
        %234 = vst [vmem:[#allocation2 + $0xb8] sm:$0xff] 0.0
        %235 = vst [vmem:[#allocation2 + $0xc0] sm:$0xff] 0.0
        %236 = vst [vmem:[#allocation2 + $0xc8] sm:$0xff] 0.0
        %237 = vst [vmem:[#allocation2 + $0xd0] sm:$0xff] 0.0
        %238 = vst.msk [vmem:[#allocation2 + $0xd8] sm:$0xff] %vm216, 0.0
        %239 = vst [vmem:[#allocation2 + $0xe0] sm:$0xff] 0.0
        %240 = vst [vmem:[#allocation2 + $0xe8] sm:$0xff] 0.0
        %241 = vst [vmem:[#allocation2 + $0xf0] sm:$0xff] 0.0
        %242 = vst [vmem:[#allocation2 + $0xf8] sm:$0xff] 0.0
        %243 = vst [vmem:[#allocation2 + $0x100] sm:$0xff] 0.0
        %244 = vst [vmem:[#allocation2 + $0x108] sm:$0xff] 0.0
        %245 = vst.msk [vmem:[#allocation2 + $0x110] sm:$0xff] %vm216, 0.0
        %246 = vst [vmem:[#allocation2 + $0x118] sm:$0xff] 0.0
        %247 = vst [vmem:[#allocation2 + $0x120] sm:$0xff] 0.0
        %248 = vst [vmem:[#allocation2 + $0x128] sm:$0xff] 0.0
        %249 = vst [vmem:[#allocation2 + $0x130] sm:$0xff] 0.0
        %250 = vst [vmem:[#allocation2 + $0x138] sm:$0xff] 0.0
        %251 = vst [vmem:[#allocation2 + $0x140] sm:$0xff] 0.0
        %252 = vst.msk [vmem:[#allocation2 + $0x148] sm:$0xff] %vm216, 0.0
        %253 = vst [vmem:[#allocation2 + $0x150] sm:$0xff] 0.0
        %254 = vst [vmem:[#allocation2 + $0x158] sm:$0xff] 0.0
        %255 = vst [vmem:[#allocation2 + $0x160] sm:$0xff] 0.0
        %256 = vst [vmem:[#allocation2 + $0x168] sm:$0xff] 0.0
        %257 = vst [vmem:[#allocation2 + $0x170] sm:$0xff] 0.0
        %258 = vst [vmem:[#allocation2 + $0x178] sm:$0xff] 0.0
        %259 = vst.msk [vmem:[#allocation2 + $0x180] sm:$0xff] %vm216, 0.0
        %260 = vst [vmem:[#allocation2 + $0x188] sm:$0xff] 0.0
        %261 = vst [vmem:[#allocation2 + $0x190] sm:$0xff] 0.0
        %262 = vst [vmem:[#allocation2 + $0x198] sm:$0xff] 0.0
        %263 = vst [vmem:[#allocation2 + $0x1a0] sm:$0xff] 0.0
        %264 = vst [vmem:[#allocation2 + $0x1a8] sm:$0xff] 0.0
        %265 = vst [vmem:[#allocation2 + $0x1b0] sm:$0xff] 0.0
        %266 = vst.msk [vmem:[#allocation2 + $0x1b8] sm:$0xff] %vm216, 0.0
        %267 = vst [vmem:[#allocation2 + $0x1c0] sm:$0xff] 0.0
        %268 = vst [vmem:[#allocation2 + $0x1c8] sm:$0xff] 0.0
        %269 = vst [vmem:[#allocation2 + $0x1d0] sm:$0xff] 0.0
        %270 = vst [vmem:[#allocation2 + $0x1d8] sm:$0xff] 0.0
        %271 = vst [vmem:[#allocation2 + $0x1e0] sm:$0xff] 0.0
        %272 = vst [vmem:[#allocation2 + $0x1e8] sm:$0xff] 0.0
        %273 = vst.msk [vmem:[#allocation2 + $0x1f0] sm:$0xff] %vm216, 0.0
        %274 = vst [vmem:[#allocation2 + $0x1f8] sm:$0xff] 0.0
        %275 = vst [vmem:[#allocation2 + $0x200] sm:$0xff] 0.0
        %276 = vst [vmem:[#allocation2 + $0x208] sm:$0xff] 0.0
        %277 = vst [vmem:[#allocation2 + $0x210] sm:$0xff] 0.0
        %278 = vst [vmem:[#allocation2 + $0x218] sm:$0xff] 0.0
        %279 = vst [vmem:[#allocation2 + $0x220] sm:$0xff] 0.0
        %280 = vst.msk [vmem:[#allocation2 + $0x228] sm:$0xff] %vm216, 0.0
      $region36: #{mul_conv1x1.1} parent=31 // pred_fallthru
        _
      %v281 = vld [vmem:[%s196] sm:$0xff]
      %v282 = vld [vmem:[%s196 + $0x8] sm:$0xff]
      %v283 = vld [vmem:[%s196 + $0x10] sm:$0xff]
      %v284 = vld [vmem:[%s196 + $0x18] sm:$0xff]
      %v285 = vld [vmem:[%s196 + $0x20] sm:$0xff]
      %v286 = vld [vmem:[%s196 + $0x28] sm:$0xff]
      %v287 = vld [vmem:[%s196 + $0x30] sm:$0xff]
      %v288 = vld [vmem:[%s196 + $0x38] sm:$0xff]
      %v289 = vld [vmem:[%s196 + $0x40] sm:$0xff]
      %v290 = vld [vmem:[%s196 + $0x48] sm:$0xff]
      %v291 = vld [vmem:[%s196 + $0x50] sm:$0xff]
      %v292 = vld [vmem:[%s196 + $0x58] sm:$0xff]
      %v293 = vld [vmem:[%s196 + $0x60] sm:$0xff]
      %v294 = vld [vmem:[%s196 + $0x68] sm:$0xff]
      %v295 = vld [vmem:[%s196 + $0x70] sm:$0xff]
      %v296 = vld [vmem:[%s196 + $0x78] sm:$0xff]
      %v297 = vld [vmem:[%s196 + $0x80] sm:$0xff]
      %v298 = vld [vmem:[%s196 + $0x88] sm:$0xff]
      %v299 = vld [vmem:[%s196 + $0x90] sm:$0xff]
      %v300 = vld [vmem:[%s196 + $0x98] sm:$0xff]
      %v301 = vld [vmem:[%s190] sm:$0xff]
      %v302 = vld [vmem:[%s190 + $0x8] sm:$0xff]
      %v303 = vld [vmem:[%s190 + $0x10] sm:$0xff]
      %v304 = vld [vmem:[%s190 + $0x18] sm:$0xff]
      %v305 = vld [vmem:[%s190 + $0x20] sm:$0xff]
      %v306 = vld [vmem:[%s190 + $0x28] sm:$0xff]
      %v307 = vld [vmem:[%s190 + $0x30] sm:$0xff]
      %v308 = vld [vmem:[%s190 + $0x38] sm:$0xff]
      %v309 = vld [vmem:[%s190 + $0x40] sm:$0xff]
      %v310 = vld [vmem:[%s190 + $0x48] sm:$0xff]
      %v311 = vld [vmem:[%s190 + $0x50] sm:$0xff]
      %v312 = vld [vmem:[%s190 + $0x58] sm:$0xff]
      %v313 = vld [vmem:[%s190 + $0x60] sm:$0xff]
      %v314 = vld [vmem:[%s190 + $0x68] sm:$0xff]
      %v315 = vld [vmem:[%s190 + $0x70] sm:$0xff]
      %v316 = vld [vmem:[%s190 + $0x78] sm:$0xff]
      %v317 = vld [vmem:[%s190 + $0x80] sm:$0xff]
      %v318 = vld [vmem:[%s190 + $0x88] sm:$0xff]
      %v319 = vld [vmem:[%s190 + $0x90] sm:$0xff]
      %v320 = vld [vmem:[%s190 + $0x98] sm:$0xff]
      %322 = vset.pattern.permute.xlu0 0
      %323 = vperm.xlu0 %322, %v301
      %v324 = vpop.permute.xlu0 %323
      %327 = vset.pattern.permute.xlu0 0
      %328 = vperm.xlu0 %327, %v302
      %v329 = vpop.permute.xlu0 %328
      %332 = vset.pattern.permute.xlu0 0
      %333 = vperm.xlu0 %332, %v303
      %v334 = vpop.permute.xlu0 %333
      %337 = vset.pattern.permute.xlu0 0
      %338 = vperm.xlu0 %337, %v304
      %v339 = vpop.permute.xlu0 %338
      %342 = vset.pattern.permute.xlu0 0
      %343 = vperm.xlu0 %342, %v305
      %v344 = vpop.permute.xlu0 %343
      %347 = vset.pattern.permute.xlu0 0
      %348 = vperm.xlu0 %347, %v306
      %v349 = vpop.permute.xlu0 %348
      %352 = vset.pattern.permute.xlu0 0
      %353 = vperm.xlu0 %352, %v307
      %v354 = vpop.permute.xlu0 %353
      %357 = vset.pattern.permute.xlu0 0
      %358 = vperm.xlu0 %357, %v308
      %v359 = vpop.permute.xlu0 %358
      %362 = vset.pattern.permute.xlu0 0
      %363 = vperm.xlu0 %362, %v309
      %v364 = vpop.permute.xlu0 %363
      %367 = vset.pattern.permute.xlu0 0
      %368 = vperm.xlu0 %367, %v310
      %v369 = vpop.permute.xlu0 %368
      %372 = vset.pattern.permute.xlu0 0
      %373 = vperm.xlu0 %372, %v311
      %v374 = vpop.permute.xlu0 %373
      %377 = vset.pattern.permute.xlu0 0
      %378 = vperm.xlu0 %377, %v312
      %v379 = vpop.permute.xlu0 %378
      %382 = vset.pattern.permute.xlu0 0
      %383 = vperm.xlu0 %382, %v313
      %v384 = vpop.permute.xlu0 %383
      %387 = vset.pattern.permute.xlu0 0
      %388 = vperm.xlu0 %387, %v314
      %v389 = vpop.permute.xlu0 %388
      %392 = vset.pattern.permute.xlu0 0
      %393 = vperm.xlu0 %392, %v315
      %v394 = vpop.permute.xlu0 %393
      %397 = vset.pattern.permute.xlu0 0
      %398 = vperm.xlu0 %397, %v316
      %v399 = vpop.permute.xlu0 %398
      %402 = vset.pattern.permute.xlu0 0
      %403 = vperm.xlu0 %402, %v317
      %v404 = vpop.permute.xlu0 %403
      %407 = vset.pattern.permute.xlu0 0
      %408 = vperm.xlu0 %407, %v318
      %v409 = vpop.permute.xlu0 %408
      %412 = vset.pattern.permute.xlu0 0
      %413 = vperm.xlu0 %412, %v319
      %v414 = vpop.permute.xlu0 %413
      %417 = vset.pattern.permute.xlu0 0
      %418 = vperm.xlu0 %417, %v320
      %v419 = vpop.permute.xlu0 %418
      %v421 = vmul.f32 %v281, %v324
      %v422 = vmul.f32 %v282, %v329
      %v423 = vmul.f32 %v283, %v334
      %v424 = vmul.f32 %v284, %v339
      %v425 = vmul.f32 %v285, %v344
      %v426 = vmul.f32 %v286, %v349
      %v427 = vmul.f32 %v287, %v354
      %v428 = vmul.f32 %v288, %v359
      %v429 = vmul.f32 %v289, %v364
      %v430 = vmul.f32 %v290, %v369
      %v431 = vmul.f32 %v291, %v374
      %v432 = vmul.f32 %v292, %v379
      %v433 = vmul.f32 %v293, %v384
      %v434 = vmul.f32 %v294, %v389
      %v435 = vmul.f32 %v295, %v394
      %v436 = vmul.f32 %v296, %v399
      %v437 = vmul.f32 %v297, %v404
      %v438 = vmul.f32 %v298, %v409
      %v439 = vmul.f32 %v299, %v414
      %v440 = vmul.f32 %v300, %v419
      %v441 = vpack.c.bf16 %v422, %v421
      %v442 = vpack.c.bf16 %v424, %v423
      %v443 = vpack.c.bf16 %v426, %v425
      %v444 = vpack.c.bf16 %v428, %v427
      %v445 = vpack.c.bf16 %v430, %v429
      %v446 = vpack.c.bf16 %v432, %v431
      %v447 = vpack.c.bf16 %v434, %v433
      %v448 = vpack.c.bf16 %v436, %v435
      %v449 = vpack.c.bf16 %v438, %v437
      %v450 = vpack.c.bf16 %v440, %v439
      %v451 = vld [vmem:[%s203] sm:$0xff]
      %v452 = vld [vmem:[%s203 + $0x8] sm:$0xff]
      %v453 = vld [vmem:[%s203 + $0x10] sm:$0xff]
      %v454 = vld [vmem:[%s203 + $0x18] sm:$0xff]
      %v455 = vld [vmem:[%s203 + $0x20] sm:$0xff]
      %v456 = vld [vmem:[%s203 + $0x28] sm:$0xff]
      %v457 = vld [vmem:[%s203 + $0x30] sm:$0xff]
      %v458 = vld [vmem:[%s203 + $0x38] sm:$0xff]
      %v459 = vld [vmem:[%s203 + $0x40] sm:$0xff]
      %v460 = vld [vmem:[%s203 + $0x48] sm:$0xff]
      %v461 = vld [vmem:[%s203 + $0x50] sm:$0xff]
      %v462 = vld [vmem:[%s203 + $0x58] sm:$0xff]
      %v463 = vld [vmem:[%s203 + $0x60] sm:$0xff]
      %v464 = vld [vmem:[%s203 + $0x68] sm:$0xff]
      %v465 = vld [vmem:[%s203 + $0x70] sm:$0xff]
      %v466 = vld [vmem:[%s203 + $0x78] sm:$0xff]
      %v467 = vld [vmem:[%s203 + $0x80] sm:$0xff]
      %v468 = vld [vmem:[%s203 + $0x88] sm:$0xff]
      %v469 = vld [vmem:[%s203 + $0x90] sm:$0xff]
      %v470 = vld [vmem:[%s203 + $0x98] sm:$0xff]
      %v471 = vld [vmem:[%s203 + $0xa0] sm:$0xff]
      %v472 = vld [vmem:[%s203 + $0xa8] sm:$0xff]
      %v473 = vld [vmem:[%s203 + $0xb0] sm:$0xff]
      %v474 = vld [vmem:[%s203 + $0xb8] sm:$0xff]
      %v475 = vld [vmem:[%s203 + $0xc0] sm:$0xff]
      %v476 = vld [vmem:[%s203 + $0xc8] sm:$0xff]
      %v477 = vld [vmem:[%s203 + $0xd0] sm:$0xff]
      %v478 = vld [vmem:[%s203 + $0xd8] sm:$0xff]
      %v479 = vld [vmem:[%s203 + $0xe0] sm:$0xff]
      %v480 = vld [vmem:[%s203 + $0xe8] sm:$0xff]
      %v481 = vld [vmem:[%s203 + $0xf0] sm:$0xff]
      %v482 = vld [vmem:[%s203 + $0xf8] sm:$0xff]
      %v483 = vld [vmem:[%s203 + $0x100] sm:$0xff]
      %v484 = vld [vmem:[%s203 + $0x108] sm:$0xff]
      %v485 = vld [vmem:[%s203 + $0x110] sm:$0xff]
      %v486 = vld [vmem:[%s203 + $0x118] sm:$0xff]
      %v487 = vld [vmem:[%s203 + $0x120] sm:$0xff]
      %v488 = vld [vmem:[%s203 + $0x128] sm:$0xff]
      %v489 = vld [vmem:[%s203 + $0x130] sm:$0xff]
      %v490 = vld [vmem:[%s203 + $0x138] sm:$0xff]
      %v491 = vld [vmem:[%s203 + $0x140] sm:$0xff]
      %v492 = vld [vmem:[%s203 + $0x148] sm:$0xff]
      %v493 = vld [vmem:[%s203 + $0x150] sm:$0xff]
      %v494 = vld [vmem:[%s203 + $0x158] sm:$0xff]
      %v495 = vld [vmem:[%s203 + $0x160] sm:$0xff]
      %v496 = vld [vmem:[%s203 + $0x168] sm:$0xff]
      %v497 = vld [vmem:[%s203 + $0x170] sm:$0xff]
      %v498 = vld [vmem:[%s203 + $0x178] sm:$0xff]
      %v499 = vld [vmem:[%s203 + $0x180] sm:$0xff]
      %v500 = vld [vmem:[%s203 + $0x188] sm:$0xff]
      %v501 = vld [vmem:[%s203 + $0x190] sm:$0xff]
      %v502 = vld [vmem:[%s203 + $0x198] sm:$0xff]
      %v503 = vld [vmem:[%s203 + $0x1a0] sm:$0xff]
      %v504 = vld [vmem:[%s203 + $0x1a8] sm:$0xff]
      %v505 = vld [vmem:[%s203 + $0x1b0] sm:$0xff]
      %v506 = vld [vmem:[%s203 + $0x1b8] sm:$0xff]
      %v507 = vld [vmem:[%s203 + $0x1c0] sm:$0xff]
      %v508 = vld [vmem:[%s203 + $0x1c8] sm:$0xff]
      %v509 = vld [vmem:[%s203 + $0x1d0] sm:$0xff]
      %v510 = vld [vmem:[%s203 + $0x1d8] sm:$0xff]
      %v511 = vld [vmem:[%s203 + $0x1e0] sm:$0xff]
      %v512 = vld [vmem:[%s203 + $0x1e8] sm:$0xff]
      %v513 = vld [vmem:[%s203 + $0x1f0] sm:$0xff]
      %v514 = vld [vmem:[%s203 + $0x1f8] sm:$0xff]
      %v515 = vld [vmem:[%s203 + $0x200] sm:$0xff]
      %v516 = vld [vmem:[%s203 + $0x208] sm:$0xff]
      %v517 = vld [vmem:[%s203 + $0x210] sm:$0xff]
      %v518 = vld [vmem:[%s203 + $0x218] sm:$0xff]
      %v519 = vld [vmem:[%s203 + $0x220] sm:$0xff]
      %v520 = vld [vmem:[%s203 + $0x228] sm:$0xff]
      %v521 = vld [vmem:[%s203 + $0x230] sm:$0xff]
      %v522 = vld [vmem:[%s203 + $0x238] sm:$0xff]
      %v523 = vld [vmem:[%s203 + $0x240] sm:$0xff]
      %v524 = vld [vmem:[%s203 + $0x248] sm:$0xff]
      %v525 = vld [vmem:[%s203 + $0x250] sm:$0xff]
      %v526 = vld [vmem:[%s203 + $0x258] sm:$0xff]
      %v527 = vld [vmem:[%s203 + $0x260] sm:$0xff]
      %v528 = vld [vmem:[%s203 + $0x268] sm:$0xff]
      %v529 = vld [vmem:[%s203 + $0x270] sm:$0xff]
      %v530 = vld [vmem:[%s203 + $0x278] sm:$0xff]
      %v531 = vld [vmem:[%s203 + $0x280] sm:$0xff]
      %v532 = vld [vmem:[%s203 + $0x288] sm:$0xff]
      %v533 = vld [vmem:[%s203 + $0x290] sm:$0xff]
      %v534 = vld [vmem:[%s203 + $0x298] sm:$0xff]
      %v535 = vld [vmem:[%s203 + $0x2a0] sm:$0xff]
      %v536 = vld [vmem:[%s203 + $0x2a8] sm:$0xff]
      %v537 = vld [vmem:[%s203 + $0x2b0] sm:$0xff]
      %v538 = vld [vmem:[%s203 + $0x2b8] sm:$0xff]
      %v539 = vld [vmem:[%s203 + $0x2c0] sm:$0xff]
      %v540 = vld [vmem:[%s203 + $0x2c8] sm:$0xff]
      %v541 = vld [vmem:[%s203 + $0x2d0] sm:$0xff]
      %v542 = vld [vmem:[%s203 + $0x2d8] sm:$0xff]
      %v543 = vld [vmem:[%s203 + $0x2e0] sm:$0xff]
      %v544 = vld [vmem:[%s203 + $0x2e8] sm:$0xff]
      %v545 = vld [vmem:[%s203 + $0x2f0] sm:$0xff]
      %v546 = vld [vmem:[%s203 + $0x2f8] sm:$0xff]
      %v547 = vld [vmem:[%s203 + $0x300] sm:$0xff]
      %v548 = vld [vmem:[%s203 + $0x308] sm:$0xff]
      %v549 = vld [vmem:[%s203 + $0x310] sm:$0xff]
      %v550 = vld [vmem:[%s203 + $0x318] sm:$0xff]
      %v551 = vld [vmem:[%s203 + $0x320] sm:$0xff]
      %v552 = vld [vmem:[%s203 + $0x328] sm:$0xff]
      %v553 = vld [vmem:[%s203 + $0x330] sm:$0xff]
      %v554 = vld [vmem:[%s203 + $0x338] sm:$0xff]
      %v555 = vld [vmem:[%s203 + $0x340] sm:$0xff]
      %v556 = vld [vmem:[%s203 + $0x348] sm:$0xff]
      %v557 = vld [vmem:[%s203 + $0x350] sm:$0xff]
      %v558 = vld [vmem:[%s203 + $0x358] sm:$0xff]
      %v559 = vld [vmem:[%s203 + $0x360] sm:$0xff]
      %v560 = vld [vmem:[%s203 + $0x368] sm:$0xff]
      %v561 = vld [vmem:[%s203 + $0x370] sm:$0xff]
      %v562 = vld [vmem:[%s203 + $0x378] sm:$0xff]
      %v563 = vld [vmem:[%s203 + $0x380] sm:$0xff]
      %v564 = vld [vmem:[%s203 + $0x388] sm:$0xff]
      %v565 = vld [vmem:[%s203 + $0x390] sm:$0xff]
      %v566 = vld [vmem:[%s203 + $0x398] sm:$0xff]
      %v567 = vld [vmem:[%s203 + $0x3a0] sm:$0xff]
      %v568 = vld [vmem:[%s203 + $0x3a8] sm:$0xff]
      %v569 = vld [vmem:[%s203 + $0x3b0] sm:$0xff]
      %v570 = vld [vmem:[%s203 + $0x3b8] sm:$0xff]
      %v571 = vld [vmem:[%s203 + $0x3c0] sm:$0xff]
      %v572 = vld [vmem:[%s203 + $0x3c8] sm:$0xff]
      %v573 = vld [vmem:[%s203 + $0x3d0] sm:$0xff]
      %v574 = vld [vmem:[%s203 + $0x3d8] sm:$0xff]
      %v575 = vld [vmem:[%s203 + $0x3e0] sm:$0xff]
      %v576 = vld [vmem:[%s203 + $0x3e8] sm:$0xff]
      %v577 = vld [vmem:[%s203 + $0x3f0] sm:$0xff]
      %v578 = vld [vmem:[%s203 + $0x3f8] sm:$0xff]
      %v579 = vld [vmem:[%s203 + $0x400] sm:$0xff]
      %v580 = vld [vmem:[%s203 + $0x408] sm:$0xff]
      %v581 = vld [vmem:[%s203 + $0x410] sm:$0xff]
      %v582 = vld [vmem:[%s203 + $0x418] sm:$0xff]
      %v583 = vld [vmem:[%s203 + $0x420] sm:$0xff]
      %v584 = vld [vmem:[%s203 + $0x428] sm:$0xff]
      %v585 = vld [vmem:[%s203 + $0x430] sm:$0xff]
      %v586 = vld [vmem:[%s203 + $0x438] sm:$0xff]
      %v587 = vld [vmem:[%s203 + $0x440] sm:$0xff]
      %v588 = vld [vmem:[%s203 + $0x448] sm:$0xff]
      %v589 = vld [vmem:[%s203 + $0x450] sm:$0xff]
      %v590 = vld [vmem:[%s203 + $0x458] sm:$0xff]
      %v591 = vpack.c.bf16 %v458, %v451
      %v592 = vpack.c.bf16 %v459, %v452
      %v593 = vpack.c.bf16 %v460, %v453
      %v594 = vpack.c.bf16 %v461, %v454
      %v595 = vpack.c.bf16 %v462, %v455
      %v596 = vpack.c.bf16 %v463, %v456
      %v597 = vpack.c.bf16 %v464, %v457
      %v598 = vpack.c.bf16 %v472, %v465
      %v599 = vpack.c.bf16 %v473, %v466
      %v600 = vpack.c.bf16 %v474, %v467
      %v601 = vpack.c.bf16 %v475, %v468
      %v602 = vpack.c.bf16 %v476, %v469
      %v603 = vpack.c.bf16 %v477, %v470
      %v604 = vpack.c.bf16 %v478, %v471
      %v605 = vpack.c.bf16 %v486, %v479
      %v606 = vpack.c.bf16 %v487, %v480
      %v607 = vpack.c.bf16 %v488, %v481
      %v608 = vpack.c.bf16 %v489, %v482
      %v609 = vpack.c.bf16 %v490, %v483
      %v610 = vpack.c.bf16 %v491, %v484
      %v611 = vpack.c.bf16 %v492, %v485
      %v612 = vpack.c.bf16 %v500, %v493
      %v613 = vpack.c.bf16 %v501, %v494
      %v614 = vpack.c.bf16 %v502, %v495
      %v615 = vpack.c.bf16 %v503, %v496
      %v616 = vpack.c.bf16 %v504, %v497
      %v617 = vpack.c.bf16 %v505, %v498
      %v618 = vpack.c.bf16 %v506, %v499
      %v619 = vpack.c.bf16 %v514, %v507
      %v620 = vpack.c.bf16 %v515, %v508
      %v621 = vpack.c.bf16 %v516, %v509
      %v622 = vpack.c.bf16 %v517, %v510
      %v623 = vpack.c.bf16 %v518, %v511
      %v624 = vpack.c.bf16 %v519, %v512
      %v625 = vpack.c.bf16 %v520, %v513
      %v626 = vpack.c.bf16 %v528, %v521
      %v627 = vpack.c.bf16 %v529, %v522
      %v628 = vpack.c.bf16 %v530, %v523
      %v629 = vpack.c.bf16 %v531, %v524
      %v630 = vpack.c.bf16 %v532, %v525
      %v631 = vpack.c.bf16 %v533, %v526
      %v632 = vpack.c.bf16 %v534, %v527
      %v633 = vpack.c.bf16 %v542, %v535
      %v634 = vpack.c.bf16 %v543, %v536
      %v635 = vpack.c.bf16 %v544, %v537
      %v636 = vpack.c.bf16 %v545, %v538
      %v637 = vpack.c.bf16 %v546, %v539
      %v638 = vpack.c.bf16 %v547, %v540
      %v639 = vpack.c.bf16 %v548, %v541
      %v640 = vpack.c.bf16 %v556, %v549
      %v641 = vpack.c.bf16 %v557, %v550
      %v642 = vpack.c.bf16 %v558, %v551
      %v643 = vpack.c.bf16 %v559, %v552
      %v644 = vpack.c.bf16 %v560, %v553
      %v645 = vpack.c.bf16 %v561, %v554
      %v646 = vpack.c.bf16 %v562, %v555
      %v647 = vpack.c.bf16 %v570, %v563
      %v648 = vpack.c.bf16 %v571, %v564
      %v649 = vpack.c.bf16 %v572, %v565
      %v650 = vpack.c.bf16 %v573, %v566
      %v651 = vpack.c.bf16 %v574, %v567
      %v652 = vpack.c.bf16 %v575, %v568
      %v653 = vpack.c.bf16 %v576, %v569
      %v654 = vpack.c.bf16 %v584, %v577
      %v655 = vpack.c.bf16 %v585, %v578
      %v656 = vpack.c.bf16 %v586, %v579
      %v657 = vpack.c.bf16 %v587, %v580
      %v658 = vpack.c.bf16 %v588, %v581
      %v659 = vpack.c.bf16 %v589, %v582
      %v660 = vpack.c.bf16 %v590, %v583
      %v661 = vld [vmem:[#allocation2] sm:$0xff]
      %v662 = vld [vmem:[#allocation2 + $0x8] sm:$0xff]
      %v663 = vld [vmem:[#allocation2 + $0x10] sm:$0xff]
      %v664 = vld [vmem:[#allocation2 + $0x18] sm:$0xff]
      %v665 = vld [vmem:[#allocation2 + $0x20] sm:$0xff]
      %v666 = vld [vmem:[#allocation2 + $0x28] sm:$0xff]
      %v667 = vld [vmem:[#allocation2 + $0x30] sm:$0xff]
      %v668 = vld [vmem:[#allocation2 + $0x38] sm:$0xff]
      %v669 = vld [vmem:[#allocation2 + $0x40] sm:$0xff]
      %v670 = vld [vmem:[#allocation2 + $0x48] sm:$0xff]
      %v671 = vld [vmem:[#allocation2 + $0x50] sm:$0xff]
      %v672 = vld [vmem:[#allocation2 + $0x58] sm:$0xff]
      %v673 = vld [vmem:[#allocation2 + $0x60] sm:$0xff]
      %v674 = vld [vmem:[#allocation2 + $0x68] sm:$0xff]
      %v675 = vld [vmem:[#allocation2 + $0x70] sm:$0xff]
      %v676 = vld [vmem:[#allocation2 + $0x78] sm:$0xff]
      %v677 = vld [vmem:[#allocation2 + $0x80] sm:$0xff]
      %v678 = vld [vmem:[#allocation2 + $0x88] sm:$0xff]
      %v679 = vld [vmem:[#allocation2 + $0x90] sm:$0xff]
      %v680 = vld [vmem:[#allocation2 + $0x98] sm:$0xff]
      %v681 = vld [vmem:[#allocation2 + $0xa0] sm:$0xff]
      %v682 = vld [vmem:[#allocation2 + $0xa8] sm:$0xff]
      %v683 = vld [vmem:[#allocation2 + $0xb0] sm:$0xff]
      %v684 = vld [vmem:[#allocation2 + $0xb8] sm:$0xff]
      %v685 = vld [vmem:[#allocation2 + $0xc0] sm:$0xff]
      %v686 = vld [vmem:[#allocation2 + $0xc8] sm:$0xff]
      %v687 = vld [vmem:[#allocation2 + $0xd0] sm:$0xff]
      %v688 = vld [vmem:[#allocation2 + $0xd8] sm:$0xff]
      %v689 = vld [vmem:[#allocation2 + $0xe0] sm:$0xff]
      %v690 = vld [vmem:[#allocation2 + $0xe8] sm:$0xff]
      %v691 = vld [vmem:[#allocation2 + $0xf0] sm:$0xff]
      %v692 = vld [vmem:[#allocation2 + $0xf8] sm:$0xff]
      %v693 = vld [vmem:[#allocation2 + $0x100] sm:$0xff]
      %v694 = vld [vmem:[#allocation2 + $0x108] sm:$0xff]
      %v695 = vld [vmem:[#allocation2 + $0x110] sm:$0xff]
      %v696 = vld [vmem:[#allocation2 + $0x118] sm:$0xff]
      %v697 = vld [vmem:[#allocation2 + $0x120] sm:$0xff]
      %v698 = vld [vmem:[#allocation2 + $0x128] sm:$0xff]
      %v699 = vld [vmem:[#allocation2 + $0x130] sm:$0xff]
      %v700 = vld [vmem:[#allocation2 + $0x138] sm:$0xff]
      %v701 = vld [vmem:[#allocation2 + $0x140] sm:$0xff]
      %v702 = vld [vmem:[#allocation2 + $0x148] sm:$0xff]
      %v703 = vld [vmem:[#allocation2 + $0x150] sm:$0xff]
      %v704 = vld [vmem:[#allocation2 + $0x158] sm:$0xff]
      %v705 = vld [vmem:[#allocation2 + $0x160] sm:$0xff]
      %v706 = vld [vmem:[#allocation2 + $0x168] sm:$0xff]
      %v707 = vld [vmem:[#allocation2 + $0x170] sm:$0xff]
      %v708 = vld [vmem:[#allocation2 + $0x178] sm:$0xff]
      %v709 = vld [vmem:[#allocation2 + $0x180] sm:$0xff]
      %v710 = vld [vmem:[#allocation2 + $0x188] sm:$0xff]
      %v711 = vld [vmem:[#allocation2 + $0x190] sm:$0xff]
      %v712 = vld [vmem:[#allocation2 + $0x198] sm:$0xff]
      %v713 = vld [vmem:[#allocation2 + $0x1a0] sm:$0xff]
      %v714 = vld [vmem:[#allocation2 + $0x1a8] sm:$0xff]
      %v715 = vld [vmem:[#allocation2 + $0x1b0] sm:$0xff]
      %v716 = vld [vmem:[#allocation2 + $0x1b8] sm:$0xff]
      %v717 = vld [vmem:[#allocation2 + $0x1c0] sm:$0xff]
      %v718 = vld [vmem:[#allocation2 + $0x1c8] sm:$0xff]
      %v719 = vld [vmem:[#allocation2 + $0x1d0] sm:$0xff]
      %v720 = vld [vmem:[#allocation2 + $0x1d8] sm:$0xff]
      %v721 = vld [vmem:[#allocation2 + $0x1e0] sm:$0xff]
      %v722 = vld [vmem:[#allocation2 + $0x1e8] sm:$0xff]
      %v723 = vld [vmem:[#allocation2 + $0x1f0] sm:$0xff]
      %v724 = vld [vmem:[#allocation2 + $0x1f8] sm:$0xff]
      %v725 = vld [vmem:[#allocation2 + $0x200] sm:$0xff]
      %v726 = vld [vmem:[#allocation2 + $0x208] sm:$0xff]
      %v727 = vld [vmem:[#allocation2 + $0x210] sm:$0xff]
      %v728 = vld [vmem:[#allocation2 + $0x218] sm:$0xff]
      %v729 = vld [vmem:[#allocation2 + $0x220] sm:$0xff]
      %v730 = vld [vmem:[#allocation2 + $0x228] sm:$0xff]
      %731 = vxpose.xlu0.c.b16.start [1/8] %v441, 128
      %732 = vxpose.xlu0.c.b16.cont [2/8] %v442, 128
      %733 = vxpose.xlu0.c.b16.cont [3/8] %v443, 128
      %734 = vxpose.xlu0.c.b16.cont [4/8] %v444, 128
      %735 = vxpose.xlu0.c.b16.cont [5/8] %v445, 128
      %736 = vxpose.xlu0.c.b16.cont [6/8] %v446, 128
      %737 = vxpose.xlu0.c.b16.cont [7/8] %v447, 128
      %738 = vxpose.xlu0.c.b16.end [8/8] %v448, 128
      %v739 = vpop.trf.xlu0
      %v740 = vpop.trf.xlu0
      %v741 = vpop.trf.xlu0
      %v742 = vpop.trf.xlu0
      %v743 = vpop.trf.xlu0
      %v744 = vpop.trf.xlu0
      %v745 = vpop.trf.xlu0
      %v746 = vpop.trf.xlu0
      %747 = vxpose.xlu0.c.b16.start [1/8] %v449, 128
      %748 = vxpose.xlu0.c.b16.cont [2/8] %v450, 128
      %749 = vxpose.xlu0.c.b16.cont [3/8] 0, 128
      %750 = vxpose.xlu0.c.b16.cont [4/8] 0, 128
      %751 = vxpose.xlu0.c.b16.cont [5/8] 0, 128
      %752 = vxpose.xlu0.c.b16.cont [6/8] 0, 128
      %753 = vxpose.xlu0.c.b16.cont [7/8] 0, 128
      %754 = vxpose.xlu0.c.b16.end [8/8] 0, 128
      %v755 = vpop.trf.xlu0
      %v756 = vpop.trf.xlu0
      %v757 = vpop.trf.xlu0
      %v758 = vpop.trf.xlu0
      %v759 = vpop.trf.xlu0
      %v760 = vpop.trf.xlu0
      %v761 = vpop.trf.xlu0
      %v762 = vpop.trf.xlu0
      %vm763 = vcmask 261120
      %v765 = vsel %vm763, %v755, 0
      %v768 = vsel %vm763, %v756, 0
      %v771 = vsel %vm763, %v757, 0
      %v774 = vsel %vm763, %v758, 0
      %v777 = vsel %vm763, %v759, 0
      %779 = vmatprep.subr.bf16.mxu0 %v592
      %780 = vmatpush1.bf16.msra.mxu0 %v591
      %781 = vmatprep.subr.bf16.mxu0 %v599
      %782 = vmatpush1.bf16.msra.mxu0 %v598
      %783 = vmatprep.subr.bf16.mxu0 %v606
      %784 = vmatpush1.bf16.msra.mxu0 %v605
      %785 = vmatprep.subr.bf16.mxu0 %v613
      %786 = vmatpush1.bf16.msra.mxu0 %v612
      %787 = vmatprep.subr.bf16.mxu0 %v620
      %788 = vmatpush1.bf16.msra.mxu0 %v619
      %789 = vmatprep.subr.bf16.mxu0 %v627
      %790 = vmatpush1.bf16.msra.mxu0 %v626
      %791 = vmatprep.subr.bf16.mxu0 %v634
      %792 = vmatpush1.bf16.msra.mxu0 %v633
      %793 = vmatprep.subr.bf16.mxu0 %v641
      %794 = vmatpush1.bf16.msra.mxu0 %v640
      %795 = vmatprep.subr.bf16.mxu0 %v648
      %796 = vmatpush1.bf16.msra.mxu0 %v647
      %797 = vmatprep.subr.bf16.mxu0 %v655
      %798 = vmatpush1.bf16.msra.mxu0 %v654
      %799 = vmatprep.subr.bf16.mxu0 0
      %800 = vmatpush1.bf16.msra.mxu0 0
      %801 = vmatprep.subr.bf16.mxu0 0
      %802 = vmatpush1.bf16.msra.mxu0 0
      %803 = vmatprep.subr.bf16.mxu0 0
      %804 = vmatpush1.bf16.msra.mxu0 0
      %805 = vmatprep.subr.bf16.mxu0 0
      %806 = vmatpush1.bf16.msra.mxu0 0
      %807 = vmatprep.subr.bf16.mxu0 0
      %808 = vmatpush1.bf16.msra.mxu0 0
      %809 = vmatprep.subr.bf16.mxu0 0
      %810 = vmatpush1.bf16.msra.mxu0 0
      %811 = vmatprep.mubr.bf16.mxu0 %v765
      %812 = vmatmul.mubr.bf16.gmra.mrb[0].mxu0 %v739
      %v813 = vpop.f32.mrb[0].mxu0
      %v814 = vadd.f32 0.0, %v813
      %v815 = vpop.f32.mrb[0].mxu0
      %v816 = vadd.f32 0.0, %v815
      %v817 = vpop.f32.mrb[0].mxu0
      %v818 = vadd.f32 0.0, %v817
      %v819 = vpop.f32.mrb[0].mxu0
      %v820 = vadd.f32 0.0, %v819
      %821 = vmatprep.mubr.bf16.mxu0 %v768
      %822 = vmatmul.mubr.bf16.gmra.mrb[0].mxu0 %v740
      %v823 = vpop.f32.mrb[0].mxu0
      %v824 = vadd.f32 0.0, %v823
      %v825 = vpop.f32.mrb[0].mxu0
      %v826 = vadd.f32 0.0, %v825
      %v827 = vpop.f32.mrb[0].mxu0
      %v828 = vadd.f32 0.0, %v827
      %v829 = vpop.f32.mrb[0].mxu0
      %v830 = vadd.f32 0.0, %v829
      %831 = vmatprep.mubr.bf16.mxu0 %v771
      %832 = vmatmul.mubr.bf16.gmra.mrb[0].mxu0 %v741
      %v833 = vpop.f32.mrb[0].mxu0
      %v834 = vadd.f32 0.0, %v833
      %v835 = vpop.f32.mrb[0].mxu0
      %v836 = vadd.f32 0.0, %v835
      %v837 = vpop.f32.mrb[0].mxu0
      %v838 = vadd.f32 0.0, %v837
      %v839 = vpop.f32.mrb[0].mxu0
      %v840 = vadd.f32 0.0, %v839
      %841 = vmatprep.mubr.bf16.mxu0 %v774
      %842 = vmatmul.mubr.bf16.gmra.mrb[0].mxu0 %v742
      %v843 = vpop.f32.mrb[0].mxu0
      %v844 = vadd.f32 0.0, %v843
      %v845 = vpop.f32.mrb[0].mxu0
      %v846 = vadd.f32 0.0, %v845
      %v847 = vpop.f32.mrb[0].mxu0
      %v848 = vadd.f32 0.0, %v847
      %v849 = vpop.f32.mrb[0].mxu0
      %v850 = vadd.f32 0.0, %v849
      %851 = vmatprep.mubr.bf16.mxu0 %v777
      %852 = vmatmul.mubr.bf16.gmra.mrb[0].mxu0 %v743
      %v853 = vpop.f32.mrb[0].mxu0
      %v854 = vadd.f32 0.0, %v853
      %v855 = vpop.f32.mrb[0].mxu0
      %v856 = vadd.f32 0.0, %v855
      %v857 = vpop.f32.mrb[0].mxu0
      %v858 = vadd.f32 0.0, %v857
      %v859 = vpop.f32.mrb[0].mxu0
      %v860 = vadd.f32 0.0, %v859
      %861 = vdwg.mxu0
      %862 = vmatprep.subr.bf16.mxu0 %v594
      %863 = vmatpush1.bf16.msra.mxu0 %v593
      %864 = vmatprep.subr.bf16.mxu0 %v601
      %865 = vmatpush1.bf16.msra.mxu0 %v600
      %866 = vmatprep.subr.bf16.mxu0 %v608
      %867 = vmatpush1.bf16.msra.mxu0 %v607
      %868 = vmatprep.subr.bf16.mxu0 %v615
      %869 = vmatpush1.bf16.msra.mxu0 %v614
      %870 = vmatprep.subr.bf16.mxu0 %v622
      %871 = vmatpush1.bf16.msra.mxu0 %v621
      %872 = vmatprep.subr.bf16.mxu0 %v629
      %873 = vmatpush1.bf16.msra.mxu0 %v628
      %874 = vmatprep.subr.bf16.mxu0 %v636
      %875 = vmatpush1.bf16.msra.mxu0 %v635
      %876 = vmatprep.subr.bf16.mxu0 %v643
      %877 = vmatpush1.bf16.msra.mxu0 %v642
      %878 = vmatprep.subr.bf16.mxu0 %v650
      %879 = vmatpush1.bf16.msra.mxu0 %v649
      %880 = vmatprep.subr.bf16.mxu0 %v657
      %881 = vmatpush1.bf16.msra.mxu0 %v656
      %882 = vmatprep.subr.bf16.mxu0 0
      %883 = vmatpush1.bf16.msra.mxu0 0
      %884 = vmatprep.subr.bf16.mxu0 0
      %885 = vmatpush1.bf16.msra.mxu0 0
      %886 = vmatprep.subr.bf16.mxu0 0
      %887 = vmatpush1.bf16.msra.mxu0 0
      %888 = vmatprep.subr.bf16.mxu0 0
      %889 = vmatpush1.bf16.msra.mxu0 0
      %890 = vmatprep.subr.bf16.mxu0 0
      %891 = vmatpush1.bf16.msra.mxu0 0
      %892 = vmatprep.subr.bf16.mxu0 0
      %893 = vmatpush1.bf16.msra.mxu0 0
      %894 = vmatprep.mubr.bf16.mxu0 %v765
      %895 = vmatmul.mubr.bf16.gmra.mrb[0].mxu0 %v739
      %v896 = vpop.f32.mrb[0].mxu0
      %v897 = vadd.f32 0.0, %v896
      %v898 = vpop.f32.mrb[0].mxu0
      %v899 = vadd.f32 0.0, %v898
      %v900 = vpop.f32.mrb[0].mxu0
      %v901 = vadd.f32 0.0, %v900
      %v902 = vpop.f32.mrb[0].mxu0
      %v903 = vadd.f32 0.0, %v902
      %904 = vmatprep.mubr.bf16.mxu0 %v768
      %905 = vmatmul.mubr.bf16.gmra.mrb[0].mxu0 %v740
      %v906 = vpop.f32.mrb[0].mxu0
      %v907 = vadd.f32 0.0, %v906
      %v908 = vpop.f32.mrb[0].mxu0
      %v909 = vadd.f32 0.0, %v908
      %v910 = vpop.f32.mrb[0].mxu0
      %v911 = vadd.f32 0.0, %v910
      %v912 = vpop.f32.mrb[0].mxu0
      %v913 = vadd.f32 0.0, %v912
      %914 = vmatprep.mubr.bf16.mxu0 %v771
      %915 = vmatmul.mubr.bf16.gmra.mrb[0].mxu0 %v741
      %v916 = vpop.f32.mrb[0].mxu0
      %v917 = vadd.f32 0.0, %v916
      %v918 = vpop.f32.mrb[0].mxu0
      %v919 = vadd.f32 0.0, %v918
      %v920 = vpop.f32.mrb[0].mxu0
      %v921 = vadd.f32 0.0, %v920
      %v922 = vpop.f32.mrb[0].mxu0
      %v923 = vadd.f32 0.0, %v922
      %924 = vmatprep.mubr.bf16.mxu0 %v774
      %925 = vmatmul.mubr.bf16.gmra.mrb[0].mxu0 %v742
      %v926 = vpop.f32.mrb[0].mxu0
      %v927 = vadd.f32 0.0, %v926
      %v928 = vpop.f32.mrb[0].mxu0
      %v929 = vadd.f32 0.0, %v928
      %v930 = vpop.f32.mrb[0].mxu0
      %v931 = vadd.f32 0.0, %v930
      %v932 = vpop.f32.mrb[0].mxu0
      %v933 = vadd.f32 0.0, %v932
      %934 = vmatprep.mubr.bf16.mxu0 %v777
      %935 = vmatmul.mubr.bf16.gmra.mrb[0].mxu0 %v743
      %v936 = vpop.f32.mrb[0].mxu0
      %v937 = vadd.f32 0.0, %v936
      %v938 = vpop.f32.mrb[0].mxu0
      %v939 = vadd.f32 0.0, %v938
      %v940 = vpop.f32.mrb[0].mxu0
      %v941 = vadd.f32 0.0, %v940
      %v942 = vpop.f32.mrb[0].mxu0
      %v943 = vadd.f32 0.0, %v942
      %944 = vdwg.mxu0
      %945 = vmatprep.subr.bf16.mxu0 %v596
      %946 = vmatpush1.bf16.msra.mxu0 %v595
      %947 = vmatprep.subr.bf16.mxu0 %v603
      %948 = vmatpush1.bf16.msra.mxu0 %v602
      %949 = vmatprep.subr.bf16.mxu0 %v610
      %950 = vmatpush1.bf16.msra.mxu0 %v609
      %951 = vmatprep.subr.bf16.mxu0 %v617
      %952 = vmatpush1.bf16.msra.mxu0 %v616
      %953 = vmatprep.subr.bf16.mxu0 %v624
      %954 = vmatpush1.bf16.msra.mxu0 %v623
      %955 = vmatprep.subr.bf16.mxu0 %v631
      %956 = vmatpush1.bf16.msra.mxu0 %v630
      %957 = vmatprep.subr.bf16.mxu0 %v638
      %958 = vmatpush1.bf16.msra.mxu0 %v637
      %959 = vmatprep.subr.bf16.mxu0 %v645
      %960 = vmatpush1.bf16.msra.mxu0 %v644
      %961 = vmatprep.subr.bf16.mxu0 %v652
      %962 = vmatpush1.bf16.msra.mxu0 %v651
      %963 = vmatprep.subr.bf16.mxu0 %v659
      %964 = vmatpush1.bf16.msra.mxu0 %v658
      %965 = vmatprep.subr.bf16.mxu0 0
      %966 = vmatpush1.bf16.msra.mxu0 0
      %967 = vmatprep.subr.bf16.mxu0 0
      %968 = vmatpush1.bf16.msra.mxu0 0
      %969 = vmatprep.subr.bf16.mxu0 0
      %970 = vmatpush1.bf16.msra.mxu0 0
      %971 = vmatprep.subr.bf16.mxu0 0
      %972 = vmatpush1.bf16.msra.mxu0 0
      %973 = vmatprep.subr.bf16.mxu0 0
      %974 = vmatpush1.bf16.msra.mxu0 0
      %975 = vmatprep.subr.bf16.mxu0 0
      %976 = vmatpush1.bf16.msra.mxu0 0
      %977 = vmatprep.mubr.bf16.mxu0 %v765
      %978 = vmatmul.mubr.bf16.gmra.mrb[0].mxu0 %v739
      %v979 = vpop.f32.mrb[0].mxu0
      %v980 = vadd.f32 0.0, %v979
      %v981 = vpop.f32.mrb[0].mxu0
      %v982 = vadd.f32 0.0, %v981
      %v983 = vpop.f32.mrb[0].mxu0
      %v984 = vadd.f32 0.0, %v983
      %v985 = vpop.f32.mrb[0].mxu0
      %v986 = vadd.f32 0.0, %v985
      %987 = vmatprep.mubr.bf16.mxu0 %v768
      %988 = vmatmul.mubr.bf16.gmra.mrb[0].mxu0 %v740
      %v989 = vpop.f32.mrb[0].mxu0
      %v990 = vadd.f32 0.0, %v989
      %v991 = vpop.f32.mrb[0].mxu0
      %v992 = vadd.f32 0.0, %v991
      %v993 = vpop.f32.mrb[0].mxu0
      %v994 = vadd.f32 0.0, %v993
      %v995 = vpop.f32.mrb[0].mxu0
      %v996 = vadd.f32 0.0, %v995
      %997 = vmatprep.mubr.bf16.mxu0 %v771
      %998 = vmatmul.mubr.bf16.gmra.mrb[0].mxu0 %v741
      %v999 = vpop.f32.mrb[0].mxu0
      %v1000 = vadd.f32 0.0, %v999
      %v1001 = vpop.f32.mrb[0].mxu0
      %v1002 = vadd.f32 0.0, %v1001
      %v1003 = vpop.f32.mrb[0].mxu0
      %v1004 = vadd.f32 0.0, %v1003
      %v1005 = vpop.f32.mrb[0].mxu0
      %v1006 = vadd.f32 0.0, %v1005
      %1007 = vmatprep.mubr.bf16.mxu0 %v774
      %1008 = vmatmul.mubr.bf16.gmra.mrb[0].mxu0 %v742
      %v1009 = vpop.f32.mrb[0].mxu0
      %v1010 = vadd.f32 0.0, %v1009
      %v1011 = vpop.f32.mrb[0].mxu0
      %v1012 = vadd.f32 0.0, %v1011
      %v1013 = vpop.f32.mrb[0].mxu0
      %v1014 = vadd.f32 0.0, %v1013
      %v1015 = vpop.f32.mrb[0].mxu0
      %v1016 = vadd.f32 0.0, %v1015
      %1017 = vmatprep.mubr.bf16.mxu0 %v777
      %1018 = vmatmul.mubr.bf16.gmra.mrb[0].mxu0 %v743
      %v1019 = vpop.f32.mrb[0].mxu0
      %v1020 = vadd.f32 0.0, %v1019
      %v1021 = vpop.f32.mrb[0].mxu0
      %v1022 = vadd.f32 0.0, %v1021
      %v1023 = vpop.f32.mrb[0].mxu0
      %v1024 = vadd.f32 0.0, %v1023
      %v1025 = vpop.f32.mrb[0].mxu0
      %v1026 = vadd.f32 0.0, %v1025
      %1027 = vdwg.mxu0
      %1028 = vmatprep.subr.bf16.mxu0 0
      %1029 = vmatpush1.bf16.msra.mxu0 %v597
      %1030 = vmatprep.subr.bf16.mxu0 0
      %1031 = vmatpush1.bf16.msra.mxu0 %v604
      %1032 = vmatprep.subr.bf16.mxu0 0
      %1033 = vmatpush1.bf16.msra.mxu0 %v611
      %1034 = vmatprep.subr.bf16.mxu0 0
      %1035 = vmatpush1.bf16.msra.mxu0 %v618
      %1036 = vmatprep.subr.bf16.mxu0 0
      %1037 = vmatpush1.bf16.msra.mxu0 %v625
      %1038 = vmatprep.subr.bf16.mxu0 0
      %1039 = vmatpush1.bf16.msra.mxu0 %v632
      %1040 = vmatprep.subr.bf16.mxu0 0
      %1041 = vmatpush1.bf16.msra.mxu0 %v639
      %1042 = vmatprep.subr.bf16.mxu0 0
      %1043 = vmatpush1.bf16.msra.mxu0 %v646
      %1044 = vmatprep.subr.bf16.mxu0 0
      %1045 = vmatpush1.bf16.msra.mxu0 %v653
      %1046 = vmatprep.subr.bf16.mxu0 0
      %1047 = vmatpush1.bf16.msra.mxu0 %v660
      %1048 = vmatprep.subr.bf16.mxu0 0
      %1049 = vmatpush1.bf16.msra.mxu0 0
      %1050 = vmatprep.subr.bf16.mxu0 0
      %1051 = vmatpush1.bf16.msra.mxu0 0
      %1052 = vmatprep.subr.bf16.mxu0 0
      %1053 = vmatpush1.bf16.msra.mxu0 0
      %1054 = vmatprep.subr.bf16.mxu0 0
      %1055 = vmatpush1.bf16.msra.mxu0 0
      %1056 = vmatprep.subr.bf16.mxu0 0
      %1057 = vmatpush1.bf16.msra.mxu0 0
      %1058 = vmatprep.subr.bf16.mxu0 0
      %1059 = vmatpush1.bf16.msra.mxu0 0
      %1060 = vmatprep.mubr.bf16.mxu0 %v765
      %1061 = vmatmul.mubr.bf16.gmra.mrb[0].mxu0 %v739
      %v1062 = vpop.f32.mrb[0].mxu0
      %v1063 = vadd.f32 0.0, %v1062
      %v1064 = vpop.f32.mrb[0].mxu0
      %v1065 = vpop.f32.mrb[0].mxu0
      %v1066 = vadd.f32 0.0, %v1065
      %v1067 = vpop.f32.mrb[0].mxu0
      %1068 = vmatprep.mubr.bf16.mxu0 %v768
      %1069 = vmatmul.mubr.bf16.gmra.mrb[0].mxu0 %v740
      %v1070 = vpop.f32.mrb[0].mxu0
      %v1071 = vadd.f32 0.0, %v1070
      %v1072 = vpop.f32.mrb[0].mxu0
      %v1073 = vpop.f32.mrb[0].mxu0
      %v1074 = vadd.f32 0.0, %v1073
      %v1075 = vpop.f32.mrb[0].mxu0
      %1076 = vmatprep.mubr.bf16.mxu0 %v771
      %1077 = vmatmul.mubr.bf16.gmra.mrb[0].mxu0 %v741
      %v1078 = vpop.f32.mrb[0].mxu0
      %v1079 = vadd.f32 0.0, %v1078
      %v1080 = vpop.f32.mrb[0].mxu0
      %v1081 = vpop.f32.mrb[0].mxu0
      %v1082 = vadd.f32 0.0, %v1081
      %v1083 = vpop.f32.mrb[0].mxu0
      %1084 = vmatprep.mubr.bf16.mxu0 %v774
      %1085 = vmatmul.mubr.bf16.gmra.mrb[0].mxu0 %v742
      %v1086 = vpop.f32.mrb[0].mxu0
      %v1087 = vadd.f32 0.0, %v1086
      %v1088 = vpop.f32.mrb[0].mxu0
      %v1089 = vpop.f32.mrb[0].mxu0
      %v1090 = vadd.f32 0.0, %v1089
      %v1091 = vpop.f32.mrb[0].mxu0
      %1092 = vmatprep.mubr.bf16.mxu0 %v777
      %1093 = vmatmul.mubr.bf16.gmra.mrb[0].mxu0 %v743
      %v1094 = vpop.f32.mrb[0].mxu0
      %v1095 = vadd.f32 0.0, %v1094
      %v1096 = vpop.f32.mrb[0].mxu0
      %v1097 = vpop.f32.mrb[0].mxu0
      %v1098 = vadd.f32 0.0, %v1097
      %v1099 = vpop.f32.mrb[0].mxu0
      %1100 = vdwg.mxu0
      %v1101 = vadd.f32 %v661, %v814
      %v1102 = vadd.f32 %v662, %v816
      %v1103 = vadd.f32 %v663, %v897
      %v1104 = vadd.f32 %v664, %v899
      %v1105 = vadd.f32 %v665, %v980
      %v1106 = vadd.f32 %v666, %v982
      %v1107 = vadd.f32 %v667, %v1063
      %v1108 = vadd.f32 %v668, %v818
      %v1109 = vadd.f32 %v669, %v820
      %v1110 = vadd.f32 %v670, %v901
      %v1111 = vadd.f32 %v671, %v903
      %v1112 = vadd.f32 %v672, %v984
      %v1113 = vadd.f32 %v673, %v986
      %v1114 = vadd.f32 %v674, %v1066
      %v1115 = vadd.f32 %v675, %v824
      %v1116 = vadd.f32 %v676, %v826
      %v1117 = vadd.f32 %v677, %v907
      %v1118 = vadd.f32 %v678, %v909
      %v1119 = vadd.f32 %v679, %v990
      %v1120 = vadd.f32 %v680, %v992
      %v1121 = vadd.f32 %v681, %v1071
      %v1122 = vadd.f32 %v682, %v828
      %v1123 = vadd.f32 %v683, %v830
      %v1124 = vadd.f32 %v684, %v911
      %v1125 = vadd.f32 %v685, %v913
      %v1126 = vadd.f32 %v686, %v994
      %v1127 = vadd.f32 %v687, %v996
      %v1128 = vadd.f32 %v688, %v1074
      %v1129 = vadd.f32 %v689, %v834
      %v1130 = vadd.f32 %v690, %v836
      %v1131 = vadd.f32 %v691, %v917
      %v1132 = vadd.f32 %v692, %v919
      %v1133 = vadd.f32 %v693, %v1000
      %v1134 = vadd.f32 %v694, %v1002
      %v1135 = vadd.f32 %v695, %v1079
      %v1136 = vadd.f32 %v696, %v838
      %v1137 = vadd.f32 %v697, %v840
      %v1138 = vadd.f32 %v698, %v921
      %v1139 = vadd.f32 %v699, %v923
      %v1140 = vadd.f32 %v700, %v1004
      %v1141 = vadd.f32 %v701, %v1006
      %v1142 = vadd.f32 %v702, %v1082
      %v1143 = vadd.f32 %v703, %v844
      %v1144 = vadd.f32 %v704, %v846
      %v1145 = vadd.f32 %v705, %v927
      %v1146 = vadd.f32 %v706, %v929
      %v1147 = vadd.f32 %v707, %v1010
      %v1148 = vadd.f32 %v708, %v1012
      %v1149 = vadd.f32 %v709, %v1087
      %v1150 = vadd.f32 %v710, %v848
      %v1151 = vadd.f32 %v711, %v850
      %v1152 = vadd.f32 %v712, %v931
      %v1153 = vadd.f32 %v713, %v933
      %v1154 = vadd.f32 %v714, %v1014
      %v1155 = vadd.f32 %v715, %v1016
      %v1156 = vadd.f32 %v716, %v1090
      %v1157 = vadd.f32 %v717, %v854
      %v1158 = vadd.f32 %v718, %v856
      %v1159 = vadd.f32 %v719, %v937
      %v1160 = vadd.f32 %v720, %v939
      %v1161 = vadd.f32 %v721, %v1020
      %v1162 = vadd.f32 %v722, %v1022
      %v1163 = vadd.f32 %v723, %v1095
      %v1164 = vadd.f32 %v724, %v858
      %v1165 = vadd.f32 %v725, %v860
      %v1166 = vadd.f32 %v726, %v941
      %v1167 = vadd.f32 %v727, %v943
      %v1168 = vadd.f32 %v728, %v1024
      %v1169 = vadd.f32 %v729, %v1026
      %v1170 = vadd.f32 %v730, %v1098
      %1171 = vst [vmem:[#allocation2] sm:$0xff] %v1101
      %1172 = vst [vmem:[#allocation2 + $0x8] sm:$0xff] %v1102
      %1173 = vst [vmem:[#allocation2 + $0x10] sm:$0xff] %v1103
      %1174 = vst [vmem:[#allocation2 + $0x18] sm:$0xff] %v1104
      %1175 = vst [vmem:[#allocation2 + $0x20] sm:$0xff] %v1105
      %1176 = vst [vmem:[#allocation2 + $0x28] sm:$0xff] %v1106
      %vm1177 = vcmask 130048
      %1178 = vst.msk [vmem:[#allocation2 + $0x30] sm:$0xff] %vm1177, %v1107
      %1179 = vst [vmem:[#allocation2 + $0x38] sm:$0xff] %v1108
      %1180 = vst [vmem:[#allocation2 + $0x40] sm:$0xff] %v1109
      %1181 = vst [vmem:[#allocation2 + $0x48] sm:$0xff] %v1110
      %1182 = vst [vmem:[#allocation2 + $0x50] sm:$0xff] %v1111
      %1183 = vst [vmem:[#allocation2 + $0x58] sm:$0xff] %v1112
      %1184 = vst [vmem:[#allocation2 + $0x60] sm:$0xff] %v1113
      %1185 = vst.msk [vmem:[#allocation2 + $0x68] sm:$0xff] %vm1177, %v1114
      %1186 = vst [vmem:[#allocation2 + $0x70] sm:$0xff] %v1115
      %1187 = vst [vmem:[#allocation2 + $0x78] sm:$0xff] %v1116
      %1188 = vst [vmem:[#allocation2 + $0x80] sm:$0xff] %v1117
      %1189 = vst [vmem:[#allocation2 + $0x88] sm:$0xff] %v1118
      %1190 = vst [vmem:[#allocation2 + $0x90] sm:$0xff] %v1119
      %1191 = vst [vmem:[#allocation2 + $0x98] sm:$0xff] %v1120
      %1192 = vst.msk [vmem:[#allocation2 + $0xa0] sm:$0xff] %vm1177, %v1121
      %1193 = vst [vmem:[#allocation2 + $0xa8] sm:$0xff] %v1122
      %1194 = vst [vmem:[#allocation2 + $0xb0] sm:$0xff] %v1123
      %1195 = vst [vmem:[#allocation2 + $0xb8] sm:$0xff] %v1124
      %1196 = vst [vmem:[#allocation2 + $0xc0] sm:$0xff] %v1125
      %1197 = vst [vmem:[#allocation2 + $0xc8] sm:$0xff] %v1126
      %1198 = vst [vmem:[#allocation2 + $0xd0] sm:$0xff] %v1127
      %1199 = vst.msk [vmem:[#allocation2 + $0xd8] sm:$0xff] %vm1177, %v1128
      %1200 = vst [vmem:[#allocation2 + $0xe0] sm:$0xff] %v1129
      %1201 = vst [vmem:[#allocation2 + $0xe8] sm:$0xff] %v1130
      %1202 = vst [vmem:[#allocation2 + $0xf0] sm:$0xff] %v1131
      %1203 = vst [vmem:[#allocation2 + $0xf8] sm:$0xff] %v1132
      %1204 = vst [vmem:[#allocation2 + $0x100] sm:$0xff] %v1133
      %1205 = vst [vmem:[#allocation2 + $0x108] sm:$0xff] %v1134
      %1206 = vst.msk [vmem:[#allocation2 + $0x110] sm:$0xff] %vm1177, %v1135
      %1207 = vst [vmem:[#allocation2 + $0x118] sm:$0xff] %v1136
      %1208 = vst [vmem:[#allocation2 + $0x120] sm:$0xff] %v1137
      %1209 = vst [vmem:[#allocation2 + $0x128] sm:$0xff] %v1138
      %1210 = vst [vmem:[#allocation2 + $0x130] sm:$0xff] %v1139
      %1211 = vst [vmem:[#allocation2 + $0x138] sm:$0xff] %v1140
      %1212 = vst [vmem:[#allocation2 + $0x140] sm:$0xff] %v1141
      %1213 = vst.msk [vmem:[#allocation2 + $0x148] sm:$0xff] %vm1177, %v1142
      %1214 = vst [vmem:[#allocation2 + $0x150] sm:$0xff] %v1143
      %1215 = vst [vmem:[#allocation2 + $0x158] sm:$0xff] %v1144
      %1216 = vst [vmem:[#allocation2 + $0x160] sm:$0xff] %v1145
      %1217 = vst [vmem:[#allocation2 + $0x168] sm:$0xff] %v1146
      %1218 = vst [vmem:[#allocation2 + $0x170] sm:$0xff] %v1147
      %1219 = vst [vmem:[#allocation2 + $0x178] sm:$0xff] %v1148
      %1220 = vst.msk [vmem:[#allocation2 + $0x180] sm:$0xff] %vm1177, %v1149
      %1221 = vst [vmem:[#allocation2 + $0x188] sm:$0xff] %v1150
      %1222 = vst [vmem:[#allocation2 + $0x190] sm:$0xff] %v1151
      %1223 = vst [vmem:[#allocation2 + $0x198] sm:$0xff] %v1152
      %1224 = vst [vmem:[#allocation2 + $0x1a0] sm:$0xff] %v1153
      %1225 = vst [vmem:[#allocation2 + $0x1a8] sm:$0xff] %v1154
      %1226 = vst [vmem:[#allocation2 + $0x1b0] sm:$0xff] %v1155
      %1227 = vst.msk [vmem:[#allocation2 + $0x1b8] sm:$0xff] %vm1177, %v1156
      %1228 = vst [vmem:[#allocation2 + $0x1c0] sm:$0xff] %v1157
      %1229 = vst [vmem:[#allocation2 + $0x1c8] sm:$0xff] %v1158
      %1230 = vst [vmem:[#allocation2 + $0x1d0] sm:$0xff] %v1159
      %1231 = vst [vmem:[#allocation2 + $0x1d8] sm:$0xff] %v1160
      %1232 = vst [vmem:[#allocation2 + $0x1e0] sm:$0xff] %v1161
      %1233 = vst [vmem:[#allocation2 + $0x1e8] sm:$0xff] %v1162
      %1234 = vst.msk [vmem:[#allocation2 + $0x1f0] sm:$0xff] %vm1177, %v1163
      %1235 = vst [vmem:[#allocation2 + $0x1f8] sm:$0xff] %v1164
      %1236 = vst [vmem:[#allocation2 + $0x200] sm:$0xff] %v1165
      %1237 = vst [vmem:[#allocation2 + $0x208] sm:$0xff] %v1166
      %1238 = vst [vmem:[#allocation2 + $0x210] sm:$0xff] %v1167
      %1239 = vst [vmem:[#allocation2 + $0x218] sm:$0xff] %v1168
      %1240 = vst [vmem:[#allocation2 + $0x220] sm:$0xff] %v1169
      %1241 = vst.msk [vmem:[#allocation2 + $0x228] sm:$0xff] %vm1177, %v1170
      %p1242 = scmp.eq.s32.totalorder %s14, 2
      // Predicated region
      $region37: #{mul_conv1x1.1} parent=31 // pred_check
        %p1243 = pneg %p1242
      $region38: #{mul_conv1x1.1} parent=31 // pred_check_branch
        %1245 = sbr.rel (%p1243) target = $region40
      $region39: #{mul_conv1x1.1} parent=31 // pred_region
        %v1246 = vld [vmem:[#allocation2] sm:$0xff]
        %v1247 = vld [vmem:[#allocation2 + $0x8] sm:$0xff]
        %v1248 = vld [vmem:[#allocation2 + $0x10] sm:$0xff]
        %v1249 = vld [vmem:[#allocation2 + $0x18] sm:$0xff]
        %v1250 = vld [vmem:[#allocation2 + $0x20] sm:$0xff]
        %v1251 = vld [vmem:[#allocation2 + $0x28] sm:$0xff]
        %v1252 = vld [vmem:[#allocation2 + $0x30] sm:$0xff]
        %v1253 = vld [vmem:[#allocation2 + $0x38] sm:$0xff]
        %v1254 = vld [vmem:[#allocation2 + $0x40] sm:$0xff]
        %v1255 = vld [vmem:[#allocation2 + $0x48] sm:$0xff]
        %v1256 = vld [vmem:[#allocation2 + $0x50] sm:$0xff]
        %v1257 = vld [vmem:[#allocation2 + $0x58] sm:$0xff]
        %v1258 = vld [vmem:[#allocation2 + $0x60] sm:$0xff]
        %v1259 = vld [vmem:[#allocation2 + $0x68] sm:$0xff]
        %v1260 = vld [vmem:[#allocation2 + $0x70] sm:$0xff]
        %v1261 = vld [vmem:[#allocation2 + $0x78] sm:$0xff]
        %v1262 = vld [vmem:[#allocation2 + $0x80] sm:$0xff]
        %v1263 = vld [vmem:[#allocation2 + $0x88] sm:$0xff]
        %v1264 = vld [vmem:[#allocation2 + $0x90] sm:$0xff]
        %v1265 = vld [vmem:[#allocation2 + $0x98] sm:$0xff]
        %v1266 = vld [vmem:[#allocation2 + $0xa0] sm:$0xff]
        %v1267 = vld [vmem:[#allocation2 + $0xa8] sm:$0xff]
        %v1268 = vld [vmem:[#allocation2 + $0xb0] sm:$0xff]
        %v1269 = vld [vmem:[#allocation2 + $0xb8] sm:$0xff]
        %v1270 = vld [vmem:[#allocation2 + $0xc0] sm:$0xff]
        %v1271 = vld [vmem:[#allocation2 + $0xc8] sm:$0xff]
        %v1272 = vld [vmem:[#allocation2 + $0xd0] sm:$0xff]
        %v1273 = vld [vmem:[#allocation2 + $0xd8] sm:$0xff]
        %v1274 = vld [vmem:[#allocation2 + $0xe0] sm:$0xff]
        %v1275 = vld [vmem:[#allocation2 + $0xe8] sm:$0xff]
        %v1276 = vld [vmem:[#allocation2 + $0xf0] sm:$0xff]
        %v1277 = vld [vmem:[#allocation2 + $0xf8] sm:$0xff]
        %v1278 = vld [vmem:[#allocation2 + $0x100] sm:$0xff]
        %v1279 = vld [vmem:[#allocation2 + $0x108] sm:$0xff]
        %v1280 = vld [vmem:[#allocation2 + $0x110] sm:$0xff]
        %v1281 = vld [vmem:[#allocation2 + $0x118] sm:$0xff]
        %v1282 = vld [vmem:[#allocation2 + $0x120] sm:$0xff]
        %v1283 = vld [vmem:[#allocation2 + $0x128] sm:$0xff]
        %v1284 = vld [vmem:[#allocation2 + $0x130] sm:$0xff]
        %v1285 = vld [vmem:[#allocation2 + $0x138] sm:$0xff]
        %v1286 = vld [vmem:[#allocation2 + $0x140] sm:$0xff]
        %v1287 = vld [vmem:[#allocation2 + $0x148] sm:$0xff]
        %v1288 = vld [vmem:[#allocation2 + $0x150] sm:$0xff]
        %v1289 = vld [vmem:[#allocation2 + $0x158] sm:$0xff]
        %v1290 = vld [vmem:[#allocation2 + $0x160] sm:$0xff]
        %v1291 = vld [vmem:[#allocation2 + $0x168] sm:$0xff]
        %v1292 = vld [vmem:[#allocation2 + $0x170] sm:$0xff]
        %v1293 = vld [vmem:[#allocation2 + $0x178] sm:$0xff]
        %v1294 = vld [vmem:[#allocation2 + $0x180] sm:$0xff]
        %v1295 = vld [vmem:[#allocation2 + $0x188] sm:$0xff]
        %v1296 = vld [vmem:[#allocation2 + $0x190] sm:$0xff]
        %v1297 = vld [vmem:[#allocation2 + $0x198] sm:$0xff]
        %v1298 = vld [vmem:[#allocation2 + $0x1a0] sm:$0xff]
        %v1299 = vld [vmem:[#allocation2 + $0x1a8] sm:$0xff]
        %v1300 = vld [vmem:[#allocation2 + $0x1b0] sm:$0xff]
        %v1301 = vld [vmem:[#allocation2 + $0x1b8] sm:$0xff]
        %v1302 = vld [vmem:[#allocation2 + $0x1c0] sm:$0xff]
        %v1303 = vld [vmem:[#allocation2 + $0x1c8] sm:$0xff]
        %v1304 = vld [vmem:[#allocation2 + $0x1d0] sm:$0xff]
        %v1305 = vld [vmem:[#allocation2 + $0x1d8] sm:$0xff]
        %v1306 = vld [vmem:[#allocation2 + $0x1e0] sm:$0xff]
        %v1307 = vld [vmem:[#allocation2 + $0x1e8] sm:$0xff]
        %v1308 = vld [vmem:[#allocation2 + $0x1f0] sm:$0xff]
        %v1309 = vld [vmem:[#allocation2 + $0x1f8] sm:$0xff]
        %v1310 = vld [vmem:[#allocation2 + $0x200] sm:$0xff]
        %v1311 = vld [vmem:[#allocation2 + $0x208] sm:$0xff]
        %v1312 = vld [vmem:[#allocation2 + $0x210] sm:$0xff]
        %v1313 = vld [vmem:[#allocation2 + $0x218] sm:$0xff]
        %v1314 = vld [vmem:[#allocation2 + $0x220] sm:$0xff]
        %v1315 = vld [vmem:[#allocation2 + $0x228] sm:$0xff]
        %1316 = vst [vmem:[%s3] sm:$0xff] %v1246
        %1317 = vst [vmem:[%s3 + $0x8] sm:$0xff] %v1247
        %1318 = vst [vmem:[%s3 + $0x10] sm:$0xff] %v1248
        %1319 = vst [vmem:[%s3 + $0x18] sm:$0xff] %v1249
        %1320 = vst [vmem:[%s3 + $0x20] sm:$0xff] %v1250
        %1321 = vst [vmem:[%s3 + $0x28] sm:$0xff] %v1251
        %1322 = vst.msk [vmem:[%s3 + $0x30] sm:$0xff] %vm1177, %v1252
        %1323 = vst [vmem:[%s3 + $0x38] sm:$0xff] %v1253
        %1324 = vst [vmem:[%s3 + $0x40] sm:$0xff] %v1254
        %1325 = vst [vmem:[%s3 + $0x48] sm:$0xff] %v1255
        %1326 = vst [vmem:[%s3 + $0x50] sm:$0xff] %v1256
        %1327 = vst [vmem:[%s3 + $0x58] sm:$0xff] %v1257
        %1328 = vst [vmem:[%s3 + $0x60] sm:$0xff] %v1258
        %1329 = vst.msk [vmem:[%s3 + $0x68] sm:$0xff] %vm1177, %v1259
        %1330 = vst [vmem:[%s3 + $0x70] sm:$0xff] %v1260
        %1331 = vst [vmem:[%s3 + $0x78] sm:$0xff] %v1261
        %1332 = vst [vmem:[%s3 + $0x80] sm:$0xff] %v1262
        %1333 = vst [vmem:[%s3 + $0x88] sm:$0xff] %v1263
        %1334 = vst [vmem:[%s3 + $0x90] sm:$0xff] %v1264
        %1335 = vst [vmem:[%s3 + $0x98] sm:$0xff] %v1265
        %1336 = vst.msk [vmem:[%s3 + $0xa0] sm:$0xff] %vm1177, %v1266
        %1337 = vst [vmem:[%s3 + $0xa8] sm:$0xff] %v1267
        %1338 = vst [vmem:[%s3 + $0xb0] sm:$0xff] %v1268
        %1339 = vst [vmem:[%s3 + $0xb8] sm:$0xff] %v1269
        %1340 = vst [vmem:[%s3 + $0xc0] sm:$0xff] %v1270
        %1341 = vst [vmem:[%s3 + $0xc8] sm:$0xff] %v1271
        %1342 = vst [vmem:[%s3 + $0xd0] sm:$0xff] %v1272
        %1343 = vst.msk [vmem:[%s3 + $0xd8] sm:$0xff] %vm1177, %v1273
        %1344 = vst [vmem:[%s3 + $0xe0] sm:$0xff] %v1274
        %1345 = vst [vmem:[%s3 + $0xe8] sm:$0xff] %v1275
        %1346 = vst [vmem:[%s3 + $0xf0] sm:$0xff] %v1276
        %1347 = vst [vmem:[%s3 + $0xf8] sm:$0xff] %v1277
        %1348 = vst [vmem:[%s3 + $0x100] sm:$0xff] %v1278
        %1349 = vst [vmem:[%s3 + $0x108] sm:$0xff] %v1279
        %1350 = vst.msk [vmem:[%s3 + $0x110] sm:$0xff] %vm1177, %v1280
        %1351 = vst [vmem:[%s3 + $0x118] sm:$0xff] %v1281
        %1352 = vst [vmem:[%s3 + $0x120] sm:$0xff] %v1282
        %1353 = vst [vmem:[%s3 + $0x128] sm:$0xff] %v1283
        %1354 = vst [vmem:[%s3 + $0x130] sm:$0xff] %v1284
        %1355 = vst [vmem:[%s3 + $0x138] sm:$0xff] %v1285
        %1356 = vst [vmem:[%s3 + $0x140] sm:$0xff] %v1286
        %1357 = vst.msk [vmem:[%s3 + $0x148] sm:$0xff] %vm1177, %v1287
        %1358 = vst [vmem:[%s3 + $0x150] sm:$0xff] %v1288
        %1359 = vst [vmem:[%s3 + $0x158] sm:$0xff] %v1289
        %1360 = vst [vmem:[%s3 + $0x160] sm:$0xff] %v1290
        %1361 = vst [vmem:[%s3 + $0x168] sm:$0xff] %v1291
        %1362 = vst [vmem:[%s3 + $0x170] sm:$0xff] %v1292
        %1363 = vst [vmem:[%s3 + $0x178] sm:$0xff] %v1293
        %1364 = vst.msk [vmem:[%s3 + $0x180] sm:$0xff] %vm1177, %v1294
        %1365 = vst [vmem:[%s3 + $0x188] sm:$0xff] %v1295
        %1366 = vst [vmem:[%s3 + $0x190] sm:$0xff] %v1296
        %1367 = vst [vmem:[%s3 + $0x198] sm:$0xff] %v1297
        %1368 = vst [vmem:[%s3 + $0x1a0] sm:$0xff] %v1298
        %1369 = vst [vmem:[%s3 + $0x1a8] sm:$0xff] %v1299
        %1370 = vst [vmem:[%s3 + $0x1b0] sm:$0xff] %v1300
        %1371 = vst.msk [vmem:[%s3 + $0x1b8] sm:$0xff] %vm1177, %v1301
        %1372 = vst [vmem:[%s3 + $0x1c0] sm:$0xff] %v1302
        %1373 = vst [vmem:[%s3 + $0x1c8] sm:$0xff] %v1303
        %1374 = vst [vmem:[%s3 + $0x1d0] sm:$0xff] %v1304
        %1375 = vst [vmem:[%s3 + $0x1d8] sm:$0xff] %v1305
        %1376 = vst [vmem:[%s3 + $0x1e0] sm:$0xff] %v1306
        %1377 = vst [vmem:[%s3 + $0x1e8] sm:$0xff] %v1307
        %1378 = vst.msk [vmem:[%s3 + $0x1f0] sm:$0xff] %vm1177, %v1308
        %1379 = vst [vmem:[%s3 + $0x1f8] sm:$0xff] %v1309
        %1380 = vst [vmem:[%s3 + $0x200] sm:$0xff] %v1310
        %1381 = vst [vmem:[%s3 + $0x208] sm:$0xff] %v1311
        %1382 = vst [vmem:[%s3 + $0x210] sm:$0xff] %v1312
        %1383 = vst [vmem:[%s3 + $0x218] sm:$0xff] %v1313
        %1384 = vst [vmem:[%s3 + $0x220] sm:$0xff] %v1314
        %1385 = vst.msk [vmem:[%s3 + $0x228] sm:$0xff] %vm1177, %v1315
      $region40: #{mul_conv1x1.1} parent=31 // pred_fallthru
        _
      // Predicated region
      $region41: #{mul_conv1x1.1} parent=31 // pred_check
        %p1386 = pneg %p105
      $region42: #{mul_conv1x1.1} parent=31 // pred_check_branch
        %1388 = sbr.rel (%p1386) target = $region44
      $region43: #{mul_conv1x1.1} parent=31 // pred_region
        _
      $region44: #{mul_conv1x1.1} parent=31 // pred_fallthru
        _
      // Predicated region
      $region45: #{mul_conv1x1.1} parent=31 // pred_check
        %p1389 = pneg %p105
      $region46: #{mul_conv1x1.1} parent=31 // pred_check_branch
        %1391 = sbr.rel (%p1389) target = $region48
      $region47: #{mul_conv1x1.1} parent=31 // pred_region
        _
      $region48: #{mul_conv1x1.1} parent=31 // pred_fallthru
        _
    $region32: #{mul_conv1x1.1} parent=5 // pred_fallthru
      _
    %p1392 = scmp.le.s32.totalorder 2, %s9
    // Predicated region
    $region49: #{mul_conv1x1.1} parent=5 // pred_check
      %p1393 = pneg %p1392
    $region50: #{mul_conv1x1.1} parent=5 // pred_check_branch
      %1395 = sbr.rel (%p1393) target = $region52
    $region51: #{mul_conv1x1.1} parent=5 // pred_region
      %s1396 = ssub.s32 %s9, 2
    $region52: #{mul_conv1x1.1} parent=5 // pred_fallthru
      _
  $region6: #{mul_conv1x1.1} parent=0 // loop_footer
    %s13 = sadd.s32 1, %s9
  $region7: #{mul_conv1x1.1} parent=0 // loop_footer_branch
    %8 = sbr.rel target = $region3
  $region8: #{mul_conv1x1.1} parent=0 // loop_exit
    _

</llo_original>
